<compile_context>
chip_gen: v7x
topology: tpu7x:2x2x1
jax: 0.10.0
libtpu: 0.0.40
codegen_flags: <defaults>
</compile_context>

<pallas_src>
import functools

import jax
import jax.numpy as jnp
import numpy as np
from jax.experimental import pallas as pl
from jax.experimental.pallas import tpu as pltpu


# ------------------------------ static sizes ------------------------------- #

_K = 5             # conv kernel size
_C1, _C2 = 6, 16   # conv output channels
_W0 = 32           # padded conv1 input width (28 + 2*2)
_H1 = 28           # conv1 output spatial
_H1P = 14          # pool1 output spatial
_H2 = 10           # conv2 output spatial
_H2P = 5           # pool2 output spatial
_L1 = _H1 * _C1    # 168  conv1 output lanes (lane = w*6 + c)
_LP = 128          # padded pool output lane width (84 / 80 lanes used)
_LS1 = _K * _W0    # 160  conv1 im2row slab lanes (lane = dy*32 + w)
_L2 = _H2 * _C2    # 160  conv2 output lanes (lane = w*16 + c)
_LS2 = _K * _LP    # 640  conv2 im2row slab lanes
_LFC = _H2P * _LP  # 640  FC3 input lanes
_LANES = 168       # packed-weight slab lane width (max operand width)


def _round_up(x, m):
    return (x + m - 1) // m * m


# Packed-weight row layout: (rows, cols) per segment; row offsets are 8-aligned.
_SEGS = ((_LS1, _L1), (_L1, _LP), (_LS2, _L2), (_L2, _LP),
         (_LFC, 120), (120, 84), (84, 10))
_OFF = []
_cursor = 0
for _rows, _cols in _SEGS:
    _OFF.append(_cursor)
    _cursor += _round_up(_rows, 8)
_OFF = tuple(_OFF)
_WPACK_ROWS = _cursor


# --------------------- one-time kernel-operand preparation ------------------ #

def _conv1_band(w1):
    """w1 [6,1,5,5] -> [160, 168]; in lane dy*32+wi, out lane wo*6+co."""
    m = np.zeros((_LS1, _L1), np.float32)
    for dy in range(_K):
        for dx in range(_K):
            for wo in range(_H1):
                m[dy * _W0 + wo + dx, wo * _C1:(wo + 1) * _C1] = w1[:, 0, dy, dx]
    return m


def _pool1_cols():
    """[168, 128]: lane w*6+c -> lane wp*6+c, averaging adjacent w pairs."""
    m = np.zeros((_L1, _LP), np.float32)
    for wp in range(_H1P):
        for c in range(_C1):
            m[(2 * wp) * _C1 + c, wp * _C1 + c] = 0.5
            m[(2 * wp + 1) * _C1 + c, wp * _C1 + c] = 0.5
    return m


def _conv2_band(w2):
    """w2 [16,6,5,5] -> [640, 160]; in lane dy*128 + wp*6 + ci, out lane wo*16+co."""
    m = np.zeros((_LS2, _L2), np.float32)
    for dy in range(_K):
        for dx in range(_K):
            for wo in range(_H2):
                for ci in range(_C1):
                    m[dy * _LP + (wo + dx) * _C1 + ci,
                      wo * _C2:(wo + 1) * _C2] = w2[:, ci, dy, dx]
    return m


def _pool2_cols():
    """[160, 128]: lane w*16+c -> lane wp*16+c, averaging adjacent w pairs."""
    m = np.zeros((_L2, _LP), np.float32)
    for wp in range(_H2P):
        for c in range(_C2):
            m[(2 * wp) * _C2 + c, wp * _C2 + c] = 0.5
            m[(2 * wp + 1) * _C2 + c, wp * _C2 + c] = 0.5
    return m


def _fc3_weight(w3):
    """Fold the PyTorch NCHW flatten order into w3: fc_in lane hp*128 + wp*16 + co
    corresponds to PyTorch feature index co*25 + hp*5 + wp."""
    m = np.zeros((_LFC, 120), np.float32)
    w3 = np.asarray(w3, np.float32)
    for hp in range(_H2P):
        for wp in range(_H2P):
            for co in range(_C2):
                src = co * (_H2P * _H2P) + hp * _H2P + wp
                m[hp * _LP + wp * _C2 + co, :] = w3[:, src]
    return m


def prepare_params(params):
    """Fold PyTorch-layout params into two packed kernel operands (one-time)."""
    w1 = np.asarray(params["w1"], np.float32)
    w2 = np.asarray(params["w2"], np.float32)
    w3 = np.asarray(params["w3"], np.float32)
    w4 = np.asarray(params["w4"], np.float32)
    w5 = np.asarray(params["w5"], np.float32)
    b1 = np.asarray(params["b1"], np.float32)
    b2 = np.asarray(params["b2"], np.float32)
    b3 = np.asarray(params["b3"], np.float32)
    b4 = np.asarray(params["b4"], np.float32)
    b5 = np.asarray(params["b5"], np.float32)

    mats = [_conv1_band(w1), _pool1_cols(), _conv2_band(w2), _pool2_cols(),
            _fc3_weight(w3), w4.T, w5.T]

    wpack = np.zeros((_WPACK_ROWS, _LANES), np.float32)
    for m, off, seg in zip(mats, _OFF, _SEGS):
        assert m.shape == seg, (m.shape, seg)
        wpack[off:off + seg[0], :seg[1]] = m

    bpack = np.zeros((8, _LANES), np.float32)
    bpack[0, :_L1] = np.tile(b1, _H1)    # conv1 bias, lane wo*6+co
    bpack[1, :_L2] = np.tile(b2, _H2)    # conv2 bias, lane wo*16+co
    bpack[2, :120] = b3
    bpack[3, :84] = b4
    bpack[4, :10] = b5

    return {"wpack": jnp.asarray(wpack, jnp.bfloat16),
            "bpack": jnp.asarray(bpack, jnp.float32)}


# ------------------------------ fused kernel -------------------------------- #

def _wslice(w_ref, seg):
    off = _OFF[seg]
    rows, cols = _SEGS[seg]
    return w_ref[off:off + rows, 0:cols]


def _lenet_kernel(x_ref, w_ref, b_ref, o_ref, *, bt):
    dot = functools.partial(jnp.dot, preferred_element_type=jnp.float32)
    bf16 = jnp.bfloat16
    b = b_ref[...]                                          # [8, 168] f32

    # ---- conv1 (one batched MXU dot over the hoisted im2row slab) + sigmoid.
    # Rows: p*14*bt + hp*bt + sample  with conv1 output row h = 2*hp + p.
    z1 = dot(x_ref[...], _wslice(w_ref, 0)) + b[0:1, 0:_L1]  # [28bt, 168] f32
    h1 = pl.reciprocal(1.0 + jnp.exp(-z1), approx=True)      # sigmoid on the EUP

    # ---- avg-pool1: over W as a lane matmul, over H as one aligned block add.
    p1w = dot(h1.astype(bf16), _wslice(w_ref, 1))            # [28bt, 128] f32
    p1 = (0.5 * (p1w[0:_H1P * bt, :] + p1w[_H1P * bt:2 * _H1P * bt, :])
          ).astype(bf16)                                     # [14bt, 128], row hp*bt+b

    # ---- conv2: 128-aligned lane concat of 5 contiguous row bands, one dot.
    slab = jnp.concatenate([p1[d * bt:(d + _H2) * bt, :] for d in range(_K)],
                           axis=1)                           # [10bt, 640] bf16
    z2 = dot(slab, _wslice(w_ref, 2)) + b[1:2, 0:_L2]        # [10bt, 160] f32

    # ---- avg-pool2 over W, then pool over H fused with the NCHW flatten.
    z2w = dot(z2.astype(bf16), _wslice(w_ref, 3))            # [10bt, 128] f32
    fc_in = jnp.concatenate(
        [0.5 * (z2w[(2 * r) * bt:(2 * r + 1) * bt, :]
                + z2w[(2 * r + 1) * bt:(2 * r + 2) * bt, :])
         for r in range(_H2P)], axis=1).astype(bf16)         # [bt, 640] bf16

    # ---- FC3 / FC4 / FC5 as batched dots (flatten permutation folded in w3).
    y = dot(fc_in, _wslice(w_ref, 4)) + b[2:3, 0:120]        # [bt, 120]
    y = dot(y.astype(bf16), _wslice(w_ref, 5)) + b[3:4, 0:84]  # [bt, 84]
    y = dot(y.astype(bf16), _wslice(w_ref, 6)) + b[4:5, 0:10]  # [bt, 10]
    o_ref[...] = y.astype(o_ref.dtype)


def lenet_forward(kparams, x_nchw, *, block_batch=128):
    n = x_nchw.shape[0]
    assert x_nchw.shape[1:] == (1, 28, 28), x_nchw.shape
    x = x_nchw.astype(jnp.float32).reshape(n, 28, 28)
    x = jnp.pad(x, ((0, 0), (2, 2), (2, 2)))                 # conv1 padding=2 -> [n,32,32]

    # conv1 im2row slab (XLA): lane = dy*32 + w, row = output h.
    slab = jnp.concatenate([x[:, dy:dy + _H1, :] for dy in range(_K)], axis=2)

    bt = min(_round_up(block_batch, 8), _round_up(n, 8))
    n_pad = _round_up(n, bt)
    if n_pad != n:
        slab = jnp.pad(slab, ((0, n_pad - n), (0, 0), (0, 0)))
    t = n_pad // bt

    # Per-tile row order: row = parity*14*bt + (h//2)*bt + sample  (h = 2*hp + p),
    # so pool1-over-H is a single aligned half-slab add inside the kernel.
    slab = slab.reshape(t, bt, _H1P, 2, _LS1)
    slab = slab.transpose(0, 3, 2, 1, 4).reshape(t, 2 * _H1P * bt, _LS1)
    slab = slab.astype(jnp.bfloat16)

    wpack = kparams["wpack"]
    bpack = kparams["bpack"]

    out = pl.pallas_call(
        functools.partial(_lenet_kernel, bt=bt),
        out_shape=jax.ShapeDtypeStruct((t, bt, 10), jnp.float32),
        grid=(t,),
        in_specs=[
            pl.BlockSpec((None, 2 * _H1P * bt, _LS1), lambda i: (i, 0, 0)),
            pl.BlockSpec(wpack.shape, lambda i: (0, 0)),
            pl.BlockSpec(bpack.shape, lambda i: (0, 0)),
        ],
        out_specs=pl.BlockSpec((None, bt, 10), lambda i: (i, 0, 0)),
        compiler_params=pltpu.CompilerParams(
            dimension_semantics=("parallel",),
            vmem_limit_bytes=48 * 1024 * 1024,
        ),
    )(slab, wpack, bpack)
    return out.reshape(n_pad, 10)[:n]


# -------------------- deterministic parameter initialization --------------- #

def init_params(key):
    ks = jax.random.split(key, 5)

    def w(k, shape, fan_in):
        return jax.random.normal(k, shape, jnp.float32) / jnp.sqrt(
            jnp.asarray(fan_in, jnp.float32))

    return {
        "w1": w(ks[0], (6, 1, 5, 5), 25),
        "b1": jnp.zeros((6,), jnp.float32),
        "w2": w(ks[1], (16, 6, 5, 5), 150),
        "b2": jnp.full((16,), 0.01, jnp.float32),
        "w3": w(ks[2], (120, 400), 400),
        "b3": jnp.full((120,), 0.02, jnp.float32),
        "w4": w(ks[3], (84, 120), 120),
        "b4": jnp.full((84,), 0.03, jnp.float32),
        "w5": w(ks[4], (10, 84), 84),
        "b5": jnp.zeros((10,), jnp.float32),
    }


# ------------------------- pure-JAX reference model ------------------------ #

def _im2col_ref(x_nhwc, k):
    n, h, w, c = x_nhwc.shape
    ho, wo = h - k + 1, w - k + 1
    patches = jnp.stack(
        [x_nhwc[:, dy:dy + ho, dx:dx + wo, :] for dy in range(k) for dx in range(k)],
        axis=3)
    return patches.reshape(n * ho * wo, k * k * c), (n, ho, wo)


def lenet_reference(params, x_nchw):
    dot = functools.partial(jnp.dot, precision=jax.lax.Precision.HIGHEST)
    x = jnp.transpose(x_nchw, (0, 2, 3, 1)).astype(jnp.float32)

    def conv(x, wq, bq, pad):
        cout, cin, k, _ = wq.shape
        if pad:
            x = jnp.pad(x, ((0, 0), (pad, pad), (pad, pad), (0, 0)))
        p, (n, ho, wo) = _im2col_ref(x, k)
        wm = jnp.transpose(wq, (2, 3, 1, 0)).reshape(k * k * cin, cout)
        return (dot(p, wm) + bq).reshape(n, ho, wo, cout)

    def pool(x):
        n, h, w_, c = x.shape
        return x.reshape(n, h // 2, 2, w_ // 2, 2, c).mean(axis=(2, 4))

    x = jax.nn.sigmoid(conv(x, params["w1"], params["b1"], 2))
    x = pool(x)
    x = conv(x, params["w2"], params["b2"], 0)
    x = pool(x)
    n = x.shape[0]
    x = jnp.transpose(x, (0, 3, 1, 2)).reshape(n, -1)       # NCHW flatten
    x = dot(x, params["w3"].T) + params["b3"]
    x = dot(x, params["w4"].T) + params["b4"]
    x = dot(x, params["w5"].T) + params["b5"]
    return x


# ----------------------------------- main ----------------------------------- #

if __name__ == "__main__":
    key = jax.random.PRNGKey(0)
    kx, kp = jax.random.split(key)
    params = init_params(kp)
    kparams = prepare_params(params)              # one-time weight folding/packing
    # LeNet's Flatten(16*5*5) implies a 28x28, single-channel input.
    x = jax.random.normal(kx, (2, 1, 28, 28), jnp.float32)

    out = jax.jit(lenet_forward)(kparams, x)
    out = jax.block_until_ready(out)
    assert out.shape == (2, 10)

    ref = lenet_reference(params, x)
    np.testing.assert_allclose(np.asarray(out), np.asarray(ref), rtol=2e-2, atol=2e-2)

    print("KERNEL_OK")
</pallas_src>

<mosaic_0001>
module attributes {stable_mosaic.version = 11 : i64} {
  func.func @_lenet_kernel(%arg0: i32, %arg1: memref<1x224x160xbf16, #tpu.memory_space<vmem>>, %arg2: memref<1976x168xbf16, #tpu.memory_space<vmem>>, %arg3: memref<8x168xf32, #tpu.memory_space<vmem>>, %arg4: memref<1x8x10xf32, #tpu.memory_space<vmem>>) attributes {dimension_semantics = [#tpu.dimension_semantics<parallel>], iteration_bounds = array<i64: 1>, scalar_prefetch = 0 : i64, scratch_operands = 0 : i64, tpu.core_type = #tpu.core_type<tc>, window_params = [{transform_indices = @transform_0, window_bounds = array<i64: 1, 224, 160>}, {pipeline_mode = #tpu.pipeline_mode<synchronous>, transform_indices = @transform_1, window_bounds = array<i64: 1976, 168>}, {pipeline_mode = #tpu.pipeline_mode<synchronous>, transform_indices = @transform_2, window_bounds = array<i64: 8, 168>}, {transform_indices = @transform_3, window_bounds = array<i64: 1, 8, 10>}]} {
    %c0 = arith.constant 0 : index
    %c0_0 = arith.constant 0 : index
    %0 = vector.load %arg3[%c0, %c0_0] : memref<8x168xf32, #tpu.memory_space<vmem>>, vector<8x168xf32>
    %c0_1 = arith.constant 0 : index
    %c0_2 = arith.constant 0 : index
    %c0_3 = arith.constant 0 : index
    %1 = vector.load %arg1[%c0_1, %c0_2, %c0_3] : memref<1x224x160xbf16, #tpu.memory_space<vmem>>, vector<1x224x160xbf16>
    %2 = vector.shape_cast %1 : vector<1x224x160xbf16> to vector<224x160xbf16>
    %c0_4 = arith.constant 0 : index
    %c0_5 = arith.constant 0 : index
    %3 = vector.load %arg2[%c0_4, %c0_5] : memref<1976x168xbf16, #tpu.memory_space<vmem>>, vector<160x168xbf16>
    %cst = arith.constant dense<0.000000e+00> : vector<224x168xf32>
    %4 = tpu.matmul %2, %3, %cst {dimension_numbers = #tpu.dot_dimension_numbers<[1], [0], [0], [1], [0, 0, 1, 1], [], []>} : vector<224x160xbf16>, vector<160x168xbf16>, vector<224x168xf32> -> vector<224x168xf32>
    %5 = vector.extract_strided_slice %0 {offsets = [0, 0], sizes = [1, 168], strides = [1, 1]} : vector<8x168xf32> to vector<1x168xf32>
    %6 = vector.broadcast %5 : vector<1x168xf32> to vector<224x168xf32>
    %7 = arith.addf %4, %6 : vector<224x168xf32>
    %cst_6 = arith.constant 0.000000e+00 : f32
    %8 = vector.broadcast %cst_6 : f32 to vector<224x168xf32>
    %9 = arith.subf %8, %7 : vector<224x168xf32>
    %10 = math.exp %9 : vector<224x168xf32>
    %cst_7 = arith.constant 1.000000e+00 : f32
    %11 = vector.broadcast %cst_7 : f32 to vector<224x168xf32>
    %12 = arith.addf %11, %10 : vector<224x168xf32>
    %13 = tpu.reciprocal %12 {approx = true} : vector<224x168xf32> -> vector<224x168xf32>
    %14 = arith.truncf %13 : vector<224x168xf32> to vector<224x168xbf16>
    %c160 = arith.constant 160 : index
    %c0_8 = arith.constant 0 : index
    %15 = vector.load %arg2[%c160, %c0_8] : memref<1976x168xbf16, #tpu.memory_space<vmem>>, vector<168x128xbf16>
    %cst_9 = arith.constant dense<0.000000e+00> : vector<224x128xf32>
    %16 = tpu.matmul %14, %15, %cst_9 {dimension_numbers = #tpu.dot_dimension_numbers<[1], [0], [0], [1], [0, 0, 1, 1], [], []>} : vector<224x168xbf16>, vector<168x128xbf16>, vector<224x128xf32> -> vector<224x128xf32>
    %17 = vector.extract_strided_slice %16 {offsets = [0, 0], sizes = [112, 128], strides = [1, 1]} : vector<224x128xf32> to vector<112x128xf32>
    %18 = vector.extract_strided_slice %16 {offsets = [112, 0], sizes = [112, 128], strides = [1, 1]} : vector<224x128xf32> to vector<112x128xf32>
    %19 = arith.addf %17, %18 : vector<112x128xf32>
    %cst_10 = arith.constant 5.000000e-01 : f32
    %20 = vector.broadcast %cst_10 : f32 to vector<112x128xf32>
    %21 = arith.mulf %20, %19 : vector<112x128xf32>
    %22 = arith.truncf %21 : vector<112x128xf32> to vector<112x128xbf16>
    %23 = vector.extract_strided_slice %22 {offsets = [0, 0], sizes = [80, 128], strides = [1, 1]} : vector<112x128xbf16> to vector<80x128xbf16>
    %24 = vector.extract_strided_slice %22 {offsets = [8, 0], sizes = [80, 128], strides = [1, 1]} : vector<112x128xbf16> to vector<80x128xbf16>
    %25 = vector.extract_strided_slice %22 {offsets = [16, 0], sizes = [80, 128], strides = [1, 1]} : vector<112x128xbf16> to vector<80x128xbf16>
    %26 = vector.extract_strided_slice %22 {offsets = [24, 0], sizes = [80, 128], strides = [1, 1]} : vector<112x128xbf16> to vector<80x128xbf16>
    %27 = vector.extract_strided_slice %22 {offsets = [32, 0], sizes = [80, 128], strides = [1, 1]} : vector<112x128xbf16> to vector<80x128xbf16>
    %28 = tpu.concatenate %23, %24, %25, %26, %27 in 1 : vector<80x128xbf16>, vector<80x128xbf16>, vector<80x128xbf16>, vector<80x128xbf16>, vector<80x128xbf16> -> vector<80x640xbf16>
    %c328 = arith.constant 328 : index
    %c0_11 = arith.constant 0 : index
    %29 = vector.load %arg2[%c328, %c0_11] : memref<1976x168xbf16, #tpu.memory_space<vmem>>, vector<640x160xbf16>
    %cst_12 = arith.constant dense<0.000000e+00> : vector<80x160xf32>
    %30 = tpu.matmul %28, %29, %cst_12 {dimension_numbers = #tpu.dot_dimension_numbers<[1], [0], [0], [1], [0, 0, 1, 1], [], []>} : vector<80x640xbf16>, vector<640x160xbf16>, vector<80x160xf32> -> vector<80x160xf32>
    %31 = vector.extract_strided_slice %0 {offsets = [1, 0], sizes = [1, 160], strides = [1, 1]} : vector<8x168xf32> to vector<1x160xf32>
    %32 = vector.broadcast %31 : vector<1x160xf32> to vector<80x160xf32>
    %33 = arith.addf %30, %32 : vector<80x160xf32>
    %34 = arith.truncf %33 : vector<80x160xf32> to vector<80x160xbf16>
    %c968 = arith.constant 968 : index
    %c0_13 = arith.constant 0 : index
    %35 = vector.load %arg2[%c968, %c0_13] : memref<1976x168xbf16, #tpu.memory_space<vmem>>, vector<160x128xbf16>
    %cst_14 = arith.constant dense<0.000000e+00> : vector<80x128xf32>
    %36 = tpu.matmul %34, %35, %cst_14 {dimension_numbers = #tpu.dot_dimension_numbers<[1], [0], [0], [1], [0, 0, 1, 1], [], []>} : vector<80x160xbf16>, vector<160x128xbf16>, vector<80x128xf32> -> vector<80x128xf32>
    %37 = vector.extract_strided_slice %36 {offsets = [0, 0], sizes = [8, 128], strides = [1, 1]} : vector<80x128xf32> to vector<8x128xf32>
    %38 = vector.extract_strided_slice %36 {offsets = [8, 0], sizes = [8, 128], strides = [1, 1]} : vector<80x128xf32> to vector<8x128xf32>
    %39 = arith.addf %37, %38 : vector<8x128xf32>
    %cst_15 = arith.constant 5.000000e-01 : f32
    %40 = vector.broadcast %cst_15 : f32 to vector<8x128xf32>
    %41 = arith.mulf %40, %39 : vector<8x128xf32>
    %42 = vector.extract_strided_slice %36 {offsets = [16, 0], sizes = [8, 128], strides = [1, 1]} : vector<80x128xf32> to vector<8x128xf32>
    %43 = vector.extract_strided_slice %36 {offsets = [24, 0], sizes = [8, 128], strides = [1, 1]} : vector<80x128xf32> to vector<8x128xf32>
    %44 = arith.addf %42, %43 : vector<8x128xf32>
    %cst_16 = arith.constant 5.000000e-01 : f32
    %45 = vector.broadcast %cst_16 : f32 to vector<8x128xf32>
    %46 = arith.mulf %45, %44 : vector<8x128xf32>
    %47 = vector.extract_strided_slice %36 {offsets = [32, 0], sizes = [8, 128], strides = [1, 1]} : vector<80x128xf32> to vector<8x128xf32>
    %48 = vector.extract_strided_slice %36 {offsets = [40, 0], sizes = [8, 128], strides = [1, 1]} : vector<80x128xf32> to vector<8x128xf32>
    %49 = arith.addf %47, %48 : vector<8x128xf32>
    %cst_17 = arith.constant 5.000000e-01 : f32
    %50 = vector.broadcast %cst_17 : f32 to vector<8x128xf32>
    %51 = arith.mulf %50, %49 : vector<8x128xf32>
    %52 = vector.extract_strided_slice %36 {offsets = [48, 0], sizes = [8, 128], strides = [1, 1]} : vector<80x128xf32> to vector<8x128xf32>
    %53 = vector.extract_strided_slice %36 {offsets = [56, 0], sizes = [8, 128], strides = [1, 1]} : vector<80x128xf32> to vector<8x128xf32>
    %54 = arith.addf %52, %53 : vector<8x128xf32>
    %cst_18 = arith.constant 5.000000e-01 : f32
    %55 = vector.broadcast %cst_18 : f32 to vector<8x128xf32>
    %56 = arith.mulf %55, %54 : vector<8x128xf32>
    %57 = vector.extract_strided_slice %36 {offsets = [64, 0], sizes = [8, 128], strides = [1, 1]} : vector<80x128xf32> to vector<8x128xf32>
    %58 = vector.extract_strided_slice %36 {offsets = [72, 0], sizes = [8, 128], strides = [1, 1]} : vector<80x128xf32> to vector<8x128xf32>
    %59 = arith.addf %57, %58 : vector<8x128xf32>
    %cst_19 = arith.constant 5.000000e-01 : f32
    %60 = vector.broadcast %cst_19 : f32 to vector<8x128xf32>
    %61 = arith.mulf %60, %59 : vector<8x128xf32>
    %62 = tpu.concatenate %41, %46, %51, %56, %61 in 1 : vector<8x128xf32>, vector<8x128xf32>, vector<8x128xf32>, vector<8x128xf32>, vector<8x128xf32> -> vector<8x640xf32>
    %63 = arith.truncf %62 : vector<8x640xf32> to vector<8x640xbf16>
    %c1128 = arith.constant 1128 : index
    %c0_20 = arith.constant 0 : index
    %64 = vector.load %arg2[%c1128, %c0_20] : memref<1976x168xbf16, #tpu.memory_space<vmem>>, vector<640x120xbf16>
    %cst_21 = arith.constant dense<0.000000e+00> : vector<8x120xf32>
    %65 = tpu.matmul %63, %64, %cst_21 {dimension_numbers = #tpu.dot_dimension_numbers<[1], [0], [0], [1], [0, 0, 1, 1], [], []>} : vector<8x640xbf16>, vector<640x120xbf16>, vector<8x120xf32> -> vector<8x120xf32>
    %66 = vector.extract_strided_slice %0 {offsets = [2, 0], sizes = [1, 120], strides = [1, 1]} : vector<8x168xf32> to vector<1x120xf32>
    %67 = vector.broadcast %66 : vector<1x120xf32> to vector<8x120xf32>
    %68 = arith.addf %65, %67 : vector<8x120xf32>
    %69 = arith.truncf %68 : vector<8x120xf32> to vector<8x120xbf16>
    %c1768 = arith.constant 1768 : index
    %c0_22 = arith.constant 0 : index
    %70 = vector.load %arg2[%c1768, %c0_22] : memref<1976x168xbf16, #tpu.memory_space<vmem>>, vector<120x84xbf16>
    %cst_23 = arith.constant dense<0.000000e+00> : vector<8x84xf32>
    %71 = tpu.matmul %69, %70, %cst_23 {dimension_numbers = #tpu.dot_dimension_numbers<[1], [0], [0], [1], [0, 0, 1, 1], [], []>} : vector<8x120xbf16>, vector<120x84xbf16>, vector<8x84xf32> -> vector<8x84xf32>
    %72 = vector.extract_strided_slice %0 {offsets = [3, 0], sizes = [1, 84], strides = [1, 1]} : vector<8x168xf32> to vector<1x84xf32>
    %73 = vector.broadcast %72 : vector<1x84xf32> to vector<8x84xf32>
    %74 = arith.addf %71, %73 : vector<8x84xf32>
    %75 = arith.truncf %74 : vector<8x84xf32> to vector<8x84xbf16>
    %c1888 = arith.constant 1888 : index
    %c0_24 = arith.constant 0 : index
    %76 = vector.load %arg2[%c1888, %c0_24] : memref<1976x168xbf16, #tpu.memory_space<vmem>>, vector<84x10xbf16>
    %cst_25 = arith.constant dense<0.000000e+00> : vector<8x10xf32>
    %77 = tpu.matmul %75, %76, %cst_25 {dimension_numbers = #tpu.dot_dimension_numbers<[1], [0], [0], [1], [0, 0, 1, 1], [], []>} : vector<8x84xbf16>, vector<84x10xbf16>, vector<8x10xf32> -> vector<8x10xf32>
    %78 = vector.extract_strided_slice %0 {offsets = [4, 0], sizes = [1, 10], strides = [1, 1]} : vector<8x168xf32> to vector<1x10xf32>
    %79 = vector.broadcast %78 : vector<1x10xf32> to vector<8x10xf32>
    %80 = arith.addf %77, %79 : vector<8x10xf32>
    %c0_26 = arith.constant 0 : index
    %c0_27 = arith.constant 0 : index
    %c0_28 = arith.constant 0 : index
    %81 = vector.load %arg4[%c0_26, %c0_27, %c0_28] : memref<1x8x10xf32, #tpu.memory_space<vmem>>, vector<1x8x10xf32>
    %82 = vector.shape_cast %81 : vector<1x8x10xf32> to vector<8x10xf32>
    %83 = vector.shape_cast %80 : vector<8x10xf32> to vector<1x8x10xf32>
    tpu.vector_store %arg4[%c0_26, %c0_27, %c0_28], %83 {strides = array<i32>} : memref<1x8x10xf32, #tpu.memory_space<vmem>>, vector<1x8x10xf32>,
    return
  }
  func.func @transform_0(%arg0: i32) -> (i32, i32, i32) {
    %c0_i32 = arith.constant 0 : i32
    %c0_i32_0 = arith.constant 0 : i32
    %c0_i32_1 = arith.constant 0 : i32
    return %arg0, %c0_i32, %c0_i32_0 : i32, i32, i32
  }
  func.func @transform_1(%arg0: i32) -> (i32, i32) {
    %c0_i32 = arith.constant 0 : i32
    %c0_i32_0 = arith.constant 0 : i32
    %c0_i32_1 = arith.constant 0 : i32
    return %c0_i32, %c0_i32_0 : i32, i32
  }
  func.func @transform_2(%arg0: i32) -> (i32, i32) {
    %c0_i32 = arith.constant 0 : i32
    %c0_i32_0 = arith.constant 0 : i32
    %c0_i32_1 = arith.constant 0 : i32
    return %c0_i32, %c0_i32_0 : i32, i32
  }
  func.func @transform_3(%arg0: i32) -> (i32, i32, i32) {
    %c0_i32 = arith.constant 0 : i32
    %c0_i32_0 = arith.constant 0 : i32
    %c0_i32_1 = arith.constant 0 : i32
    return %arg0, %c0_i32, %c0_i32_0 : i32, i32, i32
  }
}

</mosaic_0001>

<llo_original>
// kernel: lenet_forward.1
$region0: #{lenet_forward.1}
  #allocation0 [shape = 'u32[]', space=smem, size = 0x4, offset = 0x4, fixed_abs, tag = 'smem constant byte address 0x4 - core index']
  #allocation1 [shape = 'u32[144,128]{1,0:T(1,128)}', space=vmem, size = 0x12000, scoped, tag = 'internal scratch']
  %s0 = inlined_call_operand.vmem [shape: bf16[1,224,160], index: 0, kind: input, shape index: {}]
  %s1 = inlined_call_operand.vmem [shape: bf16[1976,168], index: 1, kind: input, shape index: {}]
  %s2 = inlined_call_operand.vmem [shape: f32[8,168], index: 2, kind: input, shape index: {}]
  %s3 = inlined_call_operand.vmem [shape: f32[1,8,10], index: 3, kind: output, shape index: {}]
  %s4 = sld [smem:[#allocation0]]
  $region22: #{lenet_forward.1} parent=0
    _
  %s6 = ssub.s32 1, %s4
  %s7 = scalar_select 0, %s6, %s4
  // Predicated region
  $region2: #{lenet_forward.1} parent=0 // pred_check
    _
  $region3: #{lenet_forward.1} parent=0 // pred_check_branch
    %9 = sbr.rel (0) target = $region5
  $region4: #{lenet_forward.1} parent=0 // pred_region
    _
  $region5: #{lenet_forward.1} parent=0 // pred_fallthru
    _
  // Predicated region
  $region6: #{lenet_forward.1} parent=0 // pred_check
    _
  $region7: #{lenet_forward.1} parent=0 // pred_check_branch
    %11 = sbr.rel (0) target = $region9
  $region8: #{lenet_forward.1} parent=0 // pred_region
    _
  $region9: #{lenet_forward.1} parent=0 // pred_fallthru
    _
  // Predicated region
  $region10: #{lenet_forward.1} parent=0 // pred_check
    _
  $region11: #{lenet_forward.1} parent=0 // pred_check_branch
    %13 = sbr.rel (0) target = $region13
  $region12: #{lenet_forward.1} parent=0 // pred_region
    _
  $region13: #{lenet_forward.1} parent=0 // pred_fallthru
    _
  %v15 = vld [vmem:[%s2] sm:$0xff]
  %v16 = vld [vmem:[%s2 + $0x8] sm:$0xff]
  %v17 = vld [vmem:[%s0] sm:$0xff]
  %v18 = vld [vmem:[%s0 + $0x8] sm:$0xff]
  %v19 = vld [vmem:[%s0 + $0x10] sm:$0xff]
  %v20 = vld [vmem:[%s0 + $0x18] sm:$0xff]
  %v21 = vld [vmem:[%s0 + $0x20] sm:$0xff]
  %v22 = vld [vmem:[%s0 + $0x28] sm:$0xff]
  %v23 = vld [vmem:[%s0 + $0x30] sm:$0xff]
  %v24 = vld [vmem:[%s0 + $0x38] sm:$0xff]
  %v25 = vld [vmem:[%s0 + $0x40] sm:$0xff]
  %v26 = vld [vmem:[%s0 + $0x48] sm:$0xff]
  %v27 = vld [vmem:[%s0 + $0x50] sm:$0xff]
  %v28 = vld [vmem:[%s0 + $0x58] sm:$0xff]
  %v29 = vld [vmem:[%s0 + $0x60] sm:$0xff]
  %v30 = vld [vmem:[%s0 + $0x68] sm:$0xff]
  %v31 = vld [vmem:[%s0 + $0x70] sm:$0xff]
  %v32 = vld [vmem:[%s0 + $0x78] sm:$0xff]
  %v33 = vld [vmem:[%s0 + $0x80] sm:$0xff]
  %v34 = vld [vmem:[%s0 + $0x88] sm:$0xff]
  %v35 = vld [vmem:[%s0 + $0x90] sm:$0xff]
  %v36 = vld [vmem:[%s0 + $0x98] sm:$0xff]
  %v37 = vld [vmem:[%s0 + $0xa0] sm:$0xff]
  %v38 = vld [vmem:[%s0 + $0xa8] sm:$0xff]
  %v39 = vld [vmem:[%s0 + $0xb0] sm:$0xff]
  %v40 = vld [vmem:[%s0 + $0xb8] sm:$0xff]
  %v41 = vld [vmem:[%s0 + $0xc0] sm:$0xff]
  %v42 = vld [vmem:[%s0 + $0xc8] sm:$0xff]
  %v43 = vld [vmem:[%s0 + $0xd0] sm:$0xff]
  %v44 = vld [vmem:[%s0 + $0xd8] sm:$0xff]
  %v45 = vld [vmem:[%s1] sm:$0xff]
  %v46 = vld [vmem:[%s1 + $0x8] sm:$0xff]
  %v47 = vld [vmem:[%s1 + $0x10] sm:$0xff]
  %v48 = vld [vmem:[%s1 + $0x18] sm:$0xff]
  %v49 = vld [vmem:[%s1 + $0x20] sm:$0xff]
  %v50 = vld [vmem:[%s1 + $0x28] sm:$0xff]
  %v51 = vld [vmem:[%s1 + $0x30] sm:$0xff]
  %v52 = vld [vmem:[%s1 + $0x38] sm:$0xff]
  %v53 = vld [vmem:[%s1 + $0x40] sm:$0xff]
  %v54 = vld [vmem:[%s1 + $0x48] sm:$0xff]
  %v55 = vld [vmem:[%s1 + $0x50] sm:$0xff]
  %v56 = vld [vmem:[%s1 + $0x58] sm:$0xff]
  %v57 = vld [vmem:[%s1 + $0x60] sm:$0xff]
  %v58 = vld [vmem:[%s1 + $0x68] sm:$0xff]
  %v59 = vld [vmem:[%s1 + $0x70] sm:$0xff]
  %v60 = vld [vmem:[%s1 + $0x78] sm:$0xff]
  %v61 = vld [vmem:[%s1 + $0x80] sm:$0xff]
  %v62 = vld [vmem:[%s1 + $0x88] sm:$0xff]
  %v63 = vld [vmem:[%s1 + $0x90] sm:$0xff]
  %v64 = vld [vmem:[%s1 + $0x98] sm:$0xff]
  %v65 = vlaneseq
  %v66 = vshrl.u32 %v65, 7
  %v67 = vsub.s32 0, %v66
  %v68 = vrot.slane %v15, %v67
  %v69 = vlaneseq
  %v70 = vshrl.u32 %v69, 7
  %v71 = vsub.s32 0, %v70
  %v72 = vrot.slane %v16, %v71
  %v101 = vunpack.c.l.b16 %v17
  %v102 = vunpack.c.h.b16 %v17
  %v103 = vunpack.c.l.b16 %v18
  %v104 = vunpack.c.h.b16 %v18
  %v105 = vunpack.c.l.b16 %v19
  %v106 = vunpack.c.h.b16 %v19
  %v107 = vunpack.c.l.b16 %v20
  %v108 = vunpack.c.h.b16 %v20
  %v109 = vunpack.c.l.b16 %v21
  %v110 = vunpack.c.h.b16 %v21
  %v111 = vunpack.c.l.b16 %v22
  %v112 = vunpack.c.h.b16 %v22
  %v113 = vunpack.c.l.b16 %v23
  %v114 = vunpack.c.h.b16 %v23
  %v115 = vunpack.c.l.b16 %v24
  %v116 = vunpack.c.h.b16 %v24
  %v117 = vunpack.c.l.b16 %v25
  %v118 = vunpack.c.h.b16 %v25
  %v119 = vunpack.c.l.b16 %v26
  %v120 = vunpack.c.h.b16 %v26
  %v121 = vunpack.c.l.b16 %v27
  %v122 = vunpack.c.h.b16 %v27
  %v123 = vunpack.c.l.b16 %v28
  %v124 = vunpack.c.h.b16 %v28
  %v125 = vunpack.c.l.b16 %v29
  %v126 = vunpack.c.h.b16 %v29
  %v127 = vunpack.c.l.b16 %v30
  %v128 = vunpack.c.h.b16 %v30
  %v129 = vunpack.c.l.b16 %v31
  %v130 = vunpack.c.h.b16 %v31
  %v131 = vunpack.c.l.b16 %v32
  %v132 = vunpack.c.h.b16 %v32
  %v133 = vunpack.c.l.b16 %v33
  %v134 = vunpack.c.h.b16 %v33
  %v135 = vunpack.c.l.b16 %v34
  %v136 = vunpack.c.h.b16 %v34
  %v137 = vunpack.c.l.b16 %v35
  %v138 = vunpack.c.h.b16 %v35
  %v139 = vunpack.c.l.b16 %v36
  %v140 = vunpack.c.h.b16 %v36
  %v141 = vunpack.c.l.b16 %v37
  %v142 = vunpack.c.h.b16 %v37
  %v143 = vunpack.c.l.b16 %v38
  %v144 = vunpack.c.h.b16 %v38
  %v145 = vunpack.c.l.b16 %v39
  %v146 = vunpack.c.h.b16 %v39
  %v147 = vunpack.c.l.b16 %v40
  %v148 = vunpack.c.h.b16 %v40
  %v149 = vunpack.c.l.b16 %v41
  %v150 = vunpack.c.h.b16 %v41
  %v151 = vunpack.c.l.b16 %v42
  %v152 = vunpack.c.h.b16 %v42
  %v153 = vunpack.c.l.b16 %v43
  %v154 = vunpack.c.h.b16 %v43
  %v155 = vunpack.c.l.b16 %v44
  %v156 = vunpack.c.h.b16 %v44
  %v157 = vpack.c.b16 %v103, %v101
  %v158 = vpack.c.b16 %v104, %v102
  %v159 = vpack.c.b16 %v107, %v105
  %v160 = vpack.c.b16 %v108, %v106
  %v161 = vpack.c.b16 %v111, %v109
  %v162 = vpack.c.b16 %v112, %v110
  %v163 = vpack.c.b16 %v115, %v113
  %v164 = vpack.c.b16 %v116, %v114
  %v165 = vpack.c.b16 %v119, %v117
  %v166 = vpack.c.b16 %v120, %v118
  %v167 = vpack.c.b16 %v123, %v121
  %v168 = vpack.c.b16 %v124, %v122
  %v169 = vpack.c.b16 %v127, %v125
  %v170 = vpack.c.b16 %v128, %v126
  %v171 = vpack.c.b16 %v131, %v129
  %v172 = vpack.c.b16 %v132, %v130
  %v173 = vpack.c.b16 %v135, %v133
  %v174 = vpack.c.b16 %v136, %v134
  %v175 = vpack.c.b16 %v139, %v137
  %v176 = vpack.c.b16 %v140, %v138
  %v177 = vpack.c.b16 %v143, %v141
  %v178 = vpack.c.b16 %v144, %v142
  %v179 = vpack.c.b16 %v147, %v145
  %v180 = vpack.c.b16 %v148, %v146
  %v181 = vpack.c.b16 %v151, %v149
  %v182 = vpack.c.b16 %v152, %v150
  %v183 = vpack.c.b16 %v155, %v153
  %v184 = vpack.c.b16 %v156, %v154
  %v219 = vunpack.c.l.b16 %v45
  %v220 = vunpack.c.h.b16 %v45
  %v221 = vunpack.c.l.b16 %v46
  %v222 = vunpack.c.h.b16 %v46
  %v223 = vunpack.c.l.b16 %v47
  %v224 = vunpack.c.h.b16 %v47
  %v225 = vunpack.c.l.b16 %v48
  %v226 = vunpack.c.h.b16 %v48
  %v227 = vunpack.c.l.b16 %v49
  %v228 = vunpack.c.h.b16 %v49
  %v229 = vunpack.c.l.b16 %v50
  %v230 = vunpack.c.h.b16 %v50
  %v231 = vunpack.c.l.b16 %v51
  %v232 = vunpack.c.h.b16 %v51
  %v233 = vunpack.c.l.b16 %v52
  %v234 = vunpack.c.h.b16 %v52
  %v235 = vunpack.c.l.b16 %v53
  %v236 = vunpack.c.h.b16 %v53
  %v237 = vunpack.c.l.b16 %v54
  %v238 = vunpack.c.h.b16 %v54
  %v239 = vunpack.c.l.b16 %v55
  %v240 = vunpack.c.h.b16 %v55
  %v241 = vunpack.c.l.b16 %v56
  %v242 = vunpack.c.h.b16 %v56
  %v243 = vunpack.c.l.b16 %v57
  %v244 = vunpack.c.h.b16 %v57
  %v245 = vunpack.c.l.b16 %v58
  %v246 = vunpack.c.h.b16 %v58
  %v247 = vunpack.c.l.b16 %v59
  %v248 = vunpack.c.h.b16 %v59
  %v249 = vunpack.c.l.b16 %v60
  %v250 = vunpack.c.h.b16 %v60
  %v251 = vunpack.c.l.b16 %v61
  %v252 = vunpack.c.h.b16 %v61
  %v253 = vunpack.c.l.b16 %v62
  %v254 = vunpack.c.h.b16 %v62
  %v255 = vunpack.c.l.b16 %v63
  %v256 = vunpack.c.h.b16 %v63
  %v257 = vunpack.c.l.b16 %v64
  %v258 = vunpack.c.h.b16 %v64
  %v259 = vpack.c.b16 %v221, %v219
  %v260 = vpack.c.b16 %v222, %v220
  %v261 = vpack.c.b16 %v225, %v223
  %v262 = vpack.c.b16 %v226, %v224
  %v263 = vpack.c.b16 %v229, %v227
  %v264 = vpack.c.b16 %v230, %v228
  %v265 = vpack.c.b16 %v233, %v231
  %v266 = vpack.c.b16 %v234, %v232
  %v267 = vpack.c.b16 %v237, %v235
  %v268 = vpack.c.b16 %v238, %v236
  %v269 = vpack.c.b16 %v241, %v239
  %v270 = vpack.c.b16 %v242, %v240
  %v271 = vpack.c.b16 %v245, %v243
  %v272 = vpack.c.b16 %v246, %v244
  %v273 = vpack.c.b16 %v249, %v247
  %v274 = vpack.c.b16 %v250, %v248
  %v275 = vpack.c.b16 %v253, %v251
  %v276 = vpack.c.b16 %v254, %v252
  %v277 = vpack.c.b16 %v257, %v255
  %v278 = vpack.c.b16 %v258, %v256
  %vm299 = vcmask 261120
  %v301 = vsel %vm299, %v158, 0
  %v304 = vsel %vm299, %v160, 0
  %v307 = vsel %vm299, %v162, 0
  %v310 = vsel %vm299, %v164, 0
  %v313 = vsel %vm299, %v166, 0
  %v316 = vsel %vm299, %v168, 0
  %v319 = vsel %vm299, %v170, 0
  %v322 = vsel %vm299, %v172, 0
  %v325 = vsel %vm299, %v174, 0
  %v328 = vsel %vm299, %v176, 0
  %v331 = vsel %vm299, %v178, 0
  %v334 = vsel %vm299, %v180, 0
  %v337 = vsel %vm299, %v182, 0
  %v340 = vsel %vm299, %v184, 0
  %342 = vmatprep.subr.bf16.mxu0 %v260
  %343 = vmatpush1.bf16.msra.mxu0 %v259
  %344 = vmatprep.subr.bf16.mxu0 %v262
  %345 = vmatpush1.bf16.msra.mxu0 %v261
  %346 = vmatprep.subr.bf16.mxu0 %v264
  %347 = vmatpush1.bf16.msra.mxu0 %v263
  %348 = vmatprep.subr.bf16.mxu0 %v266
  %349 = vmatpush1.bf16.msra.mxu0 %v265
  %350 = vmatprep.subr.bf16.mxu0 %v268
  %351 = vmatpush1.bf16.msra.mxu0 %v267
  %352 = vmatprep.subr.bf16.mxu0 %v270
  %353 = vmatpush1.bf16.msra.mxu0 %v269
  %354 = vmatprep.subr.bf16.mxu0 %v272
  %355 = vmatpush1.bf16.msra.mxu0 %v271
  %356 = vmatprep.subr.bf16.mxu0 %v274
  %357 = vmatpush1.bf16.msra.mxu0 %v273
  %358 = vmatprep.subr.bf16.mxu0 %v276
  %359 = vmatpush1.bf16.msra.mxu0 %v275
  %360 = vmatprep.subr.bf16.mxu0 %v278
  %361 = vmatpush1.bf16.msra.mxu0 %v277
  %362 = vmatprep.subr.bf16.mxu0 0
  %363 = vmatpush1.bf16.msra.mxu0 0
  %364 = vmatprep.subr.bf16.mxu0 0
  %365 = vmatpush1.bf16.msra.mxu0 0
  %366 = vmatprep.subr.bf16.mxu0 0
  %367 = vmatpush1.bf16.msra.mxu0 0
  %368 = vmatprep.subr.bf16.mxu0 0
  %369 = vmatpush1.bf16.msra.mxu0 0
  %370 = vmatprep.subr.bf16.mxu0 0
  %371 = vmatpush1.bf16.msra.mxu0 0
  %372 = vmatprep.subr.bf16.mxu0 0
  %373 = vmatpush1.bf16.msra.mxu0 0
  %374 = vmatprep.mubr.bf16.mxu0 %v301
  %375 = vmatmul.mubr.bf16.gmra.mrb[0].mxu0 %v157
  %v376 = vpop.f32.mrb[0].mxu0
  %v377 = vadd.f32 %v68, %v376
  %v378 = vpop.f32.mrb[0].mxu0
  %v379 = vadd.f32 %v72, %v378
  %v380 = vpop.f32.mrb[0].mxu0
  %v381 = vadd.f32 %v68, %v380
  %v382 = vpop.f32.mrb[0].mxu0
  %v383 = vadd.f32 %v72, %v382
  %384 = vmatprep.mubr.bf16.mxu0 %v304
  %385 = vmatmul.mubr.bf16.gmra.mrb[0].mxu0 %v159
  %v386 = vpop.f32.mrb[0].mxu0
  %v387 = vadd.f32 %v68, %v386
  %v388 = vpop.f32.mrb[0].mxu0
  %v389 = vadd.f32 %v72, %v388
  %v390 = vpop.f32.mrb[0].mxu0
  %v391 = vadd.f32 %v68, %v390
  %v392 = vpop.f32.mrb[0].mxu0
  %v393 = vadd.f32 %v72, %v392
  %394 = vmatprep.mubr.bf16.mxu0 %v307
  %395 = vmatmul.mubr.bf16.gmra.mrb[0].mxu0 %v161
  %v396 = vpop.f32.mrb[0].mxu0
  %v397 = vadd.f32 %v68, %v396
  %v398 = vpop.f32.mrb[0].mxu0
  %v399 = vadd.f32 %v72, %v398
  %v400 = vpop.f32.mrb[0].mxu0
  %v401 = vadd.f32 %v68, %v400
  %v402 = vpop.f32.mrb[0].mxu0
  %v403 = vadd.f32 %v72, %v402
  %404 = vmatprep.mubr.bf16.mxu0 %v310
  %405 = vmatmul.mubr.bf16.gmra.mrb[0].mxu0 %v163
  %v406 = vpop.f32.mrb[0].mxu0
  %v407 = vadd.f32 %v68, %v406
  %v408 = vpop.f32.mrb[0].mxu0
  %v409 = vadd.f32 %v72, %v408
  %v410 = vpop.f32.mrb[0].mxu0
  %v411 = vadd.f32 %v68, %v410
  %v412 = vpop.f32.mrb[0].mxu0
  %v413 = vadd.f32 %v72, %v412
  %414 = vmatprep.mubr.bf16.mxu0 %v313
  %415 = vmatmul.mubr.bf16.gmra.mrb[0].mxu0 %v165
  %v416 = vpop.f32.mrb[0].mxu0
  %v417 = vadd.f32 %v68, %v416
  %v418 = vpop.f32.mrb[0].mxu0
  %v419 = vadd.f32 %v72, %v418
  %v420 = vpop.f32.mrb[0].mxu0
  %v421 = vadd.f32 %v68, %v420
  %v422 = vpop.f32.mrb[0].mxu0
  %v423 = vadd.f32 %v72, %v422
  %424 = vmatprep.mubr.bf16.mxu0 %v316
  %425 = vmatmul.mubr.bf16.gmra.mrb[0].mxu0 %v167
  %v426 = vpop.f32.mrb[0].mxu0
  %v427 = vadd.f32 %v68, %v426
  %v428 = vpop.f32.mrb[0].mxu0
  %v429 = vadd.f32 %v72, %v428
  %v430 = vpop.f32.mrb[0].mxu0
  %v431 = vadd.f32 %v68, %v430
  %v432 = vpop.f32.mrb[0].mxu0
  %v433 = vadd.f32 %v72, %v432
  %434 = vmatprep.mubr.bf16.mxu0 %v319
  %435 = vmatmul.mubr.bf16.gmra.mrb[0].mxu0 %v169
  %v436 = vpop.f32.mrb[0].mxu0
  %v437 = vadd.f32 %v68, %v436
  %v438 = vpop.f32.mrb[0].mxu0
  %v439 = vadd.f32 %v72, %v438
  %v440 = vpop.f32.mrb[0].mxu0
  %v441 = vadd.f32 %v68, %v440
  %v442 = vpop.f32.mrb[0].mxu0
  %v443 = vadd.f32 %v72, %v442
  %444 = vmatprep.mubr.bf16.mxu0 %v322
  %445 = vmatmul.mubr.bf16.gmra.mrb[0].mxu0 %v171
  %v446 = vpop.f32.mrb[0].mxu0
  %v447 = vadd.f32 %v68, %v446
  %v448 = vpop.f32.mrb[0].mxu0
  %v449 = vadd.f32 %v72, %v448
  %v450 = vpop.f32.mrb[0].mxu0
  %v451 = vadd.f32 %v68, %v450
  %v452 = vpop.f32.mrb[0].mxu0
  %v453 = vadd.f32 %v72, %v452
  %454 = vmatprep.mubr.bf16.mxu0 %v325
  %455 = vmatmul.mubr.bf16.gmra.mrb[0].mxu0 %v173
  %v456 = vpop.f32.mrb[0].mxu0
  %v457 = vadd.f32 %v68, %v456
  %v458 = vpop.f32.mrb[0].mxu0
  %v459 = vadd.f32 %v72, %v458
  %v460 = vpop.f32.mrb[0].mxu0
  %v461 = vadd.f32 %v68, %v460
  %v462 = vpop.f32.mrb[0].mxu0
  %v463 = vadd.f32 %v72, %v462
  %464 = vmatprep.mubr.bf16.mxu0 %v328
  %465 = vmatmul.mubr.bf16.gmra.mrb[0].mxu0 %v175
  %v466 = vpop.f32.mrb[0].mxu0
  %v467 = vadd.f32 %v68, %v466
  %v468 = vpop.f32.mrb[0].mxu0
  %v469 = vadd.f32 %v72, %v468
  %v470 = vpop.f32.mrb[0].mxu0
  %v471 = vadd.f32 %v68, %v470
  %v472 = vpop.f32.mrb[0].mxu0
  %v473 = vadd.f32 %v72, %v472
  %474 = vmatprep.mubr.bf16.mxu0 %v331
  %475 = vmatmul.mubr.bf16.gmra.mrb[0].mxu0 %v177
  %v476 = vpop.f32.mrb[0].mxu0
  %v477 = vadd.f32 %v68, %v476
  %v478 = vpop.f32.mrb[0].mxu0
  %v479 = vadd.f32 %v72, %v478
  %v480 = vpop.f32.mrb[0].mxu0
  %v481 = vadd.f32 %v68, %v480
  %v482 = vpop.f32.mrb[0].mxu0
  %v483 = vadd.f32 %v72, %v482
  %484 = vmatprep.mubr.bf16.mxu0 %v334
  %485 = vmatmul.mubr.bf16.gmra.mrb[0].mxu0 %v179
  %v486 = vpop.f32.mrb[0].mxu0
  %v487 = vadd.f32 %v68, %v486
  %v488 = vpop.f32.mrb[0].mxu0
  %v489 = vadd.f32 %v72, %v488
  %v490 = vpop.f32.mrb[0].mxu0
  %v491 = vadd.f32 %v68, %v490
  %v492 = vpop.f32.mrb[0].mxu0
  %v493 = vadd.f32 %v72, %v492
  %494 = vmatprep.mubr.bf16.mxu0 %v337
  %495 = vmatmul.mubr.bf16.gmra.mrb[0].mxu0 %v181
  %v496 = vpop.f32.mrb[0].mxu0
  %v497 = vadd.f32 %v68, %v496
  %v498 = vpop.f32.mrb[0].mxu0
  %v499 = vadd.f32 %v72, %v498
  %v500 = vpop.f32.mrb[0].mxu0
  %v501 = vadd.f32 %v68, %v500
  %v502 = vpop.f32.mrb[0].mxu0
  %v503 = vadd.f32 %v72, %v502
  %504 = vmatprep.mubr.bf16.mxu0 %v340
  %505 = vmatmul.mubr.bf16.gmra.mrb[0].mxu0 %v183
  %v506 = vpop.f32.mrb[0].mxu0
  %v507 = vadd.f32 %v68, %v506
  %v508 = vpop.f32.mrb[0].mxu0
  %v509 = vadd.f32 %v72, %v508
  %v510 = vpop.f32.mrb[0].mxu0
  %v511 = vadd.f32 %v68, %v510
  %v512 = vpop.f32.mrb[0].mxu0
  %v513 = vadd.f32 %v72, %v512
  %514 = vdwg.mxu0
  %v515 = vsub.f32 0.0, %v377
  %v516 = vsub.f32 0.0, %v379
  %v517 = vsub.f32 0.0, %v381
  %v518 = vsub.f32 0.0, %v383
  %v519 = vsub.f32 0.0, %v387
  %v520 = vsub.f32 0.0, %v389
  %v521 = vsub.f32 0.0, %v391
  %v522 = vsub.f32 0.0, %v393
  %v523 = vsub.f32 0.0, %v397
  %v524 = vsub.f32 0.0, %v399
  %v525 = vsub.f32 0.0, %v401
  %v526 = vsub.f32 0.0, %v403
  %v527 = vsub.f32 0.0, %v407
  %v528 = vsub.f32 0.0, %v409
  %v529 = vsub.f32 0.0, %v411
  %v530 = vsub.f32 0.0, %v413
  %v531 = vsub.f32 0.0, %v417
  %v532 = vsub.f32 0.0, %v419
  %v533 = vsub.f32 0.0, %v421
  %v534 = vsub.f32 0.0, %v423
  %v535 = vsub.f32 0.0, %v427
  %v536 = vsub.f32 0.0, %v429
  %v537 = vsub.f32 0.0, %v431
  %v538 = vsub.f32 0.0, %v433
  %v539 = vsub.f32 0.0, %v437
  %v540 = vsub.f32 0.0, %v439
  %v541 = vsub.f32 0.0, %v441
  %v542 = vsub.f32 0.0, %v443
  %v543 = vsub.f32 0.0, %v447
  %v544 = vsub.f32 0.0, %v449
  %v545 = vsub.f32 0.0, %v451
  %v546 = vsub.f32 0.0, %v453
  %v547 = vsub.f32 0.0, %v457
  %v548 = vsub.f32 0.0, %v459
  %v549 = vsub.f32 0.0, %v461
  %v550 = vsub.f32 0.0, %v463
  %v551 = vsub.f32 0.0, %v467
  %v552 = vsub.f32 0.0, %v469
  %v553 = vsub.f32 0.0, %v471
  %v554 = vsub.f32 0.0, %v473
  %v555 = vsub.f32 0.0, %v477
  %v556 = vsub.f32 0.0, %v479
  %v557 = vsub.f32 0.0, %v481
  %v558 = vsub.f32 0.0, %v483
  %v559 = vsub.f32 0.0, %v487
  %v560 = vsub.f32 0.0, %v489
  %v561 = vsub.f32 0.0, %v491
  %v562 = vsub.f32 0.0, %v493
  %v563 = vsub.f32 0.0, %v497
  %v564 = vsub.f32 0.0, %v499
  %v565 = vsub.f32 0.0, %v501
  %v566 = vsub.f32 0.0, %v503
  %v567 = vsub.f32 0.0, %v507
  %v568 = vsub.f32 0.0, %v509
  %v569 = vsub.f32 0.0, %v511
  %v570 = vsub.f32 0.0, %v513
  %v571 = vmul.f32 %v515, 1.442695
  %v572 = vpow.pop %v571
  %v573 = vmul.f32 %v516, 1.442695
  %v574 = vpow.pop %v573
  %v575 = vmul.f32 %v517, 1.442695
  %v576 = vpow.pop %v575
  %v577 = vmul.f32 %v518, 1.442695
  %v578 = vpow.pop %v577
  %v579 = vmul.f32 %v519, 1.442695
  %v580 = vpow.pop %v579
  %v581 = vmul.f32 %v520, 1.442695
  %v582 = vpow.pop %v581
  %v583 = vmul.f32 %v521, 1.442695
  %v584 = vpow.pop %v583
  %v585 = vmul.f32 %v522, 1.442695
  %v586 = vpow.pop %v585
  %v587 = vmul.f32 %v523, 1.442695
  %v588 = vpow.pop %v587
  %v589 = vmul.f32 %v524, 1.442695
  %v590 = vpow.pop %v589
  %v591 = vmul.f32 %v525, 1.442695
  %v592 = vpow.pop %v591
  %v593 = vmul.f32 %v526, 1.442695
  %v594 = vpow.pop %v593
  %v595 = vmul.f32 %v527, 1.442695
  %v596 = vpow.pop %v595
  %v597 = vmul.f32 %v528, 1.442695
  %v598 = vpow.pop %v597
  %v599 = vmul.f32 %v529, 1.442695
  %v600 = vpow.pop %v599
  %v601 = vmul.f32 %v530, 1.442695
  %v602 = vpow.pop %v601
  %v603 = vmul.f32 %v531, 1.442695
  %v604 = vpow.pop %v603
  %v605 = vmul.f32 %v532, 1.442695
  %v606 = vpow.pop %v605
  %v607 = vmul.f32 %v533, 1.442695
  %v608 = vpow.pop %v607
  %v609 = vmul.f32 %v534, 1.442695
  %v610 = vpow.pop %v609
  %v611 = vmul.f32 %v535, 1.442695
  %v612 = vpow.pop %v611
  %v613 = vmul.f32 %v536, 1.442695
  %v614 = vpow.pop %v613
  %v615 = vmul.f32 %v537, 1.442695
  %v616 = vpow.pop %v615
  %v617 = vmul.f32 %v538, 1.442695
  %v618 = vpow.pop %v617
  %v619 = vmul.f32 %v539, 1.442695
  %v620 = vpow.pop %v619
  %v621 = vmul.f32 %v540, 1.442695
  %v622 = vpow.pop %v621
  %v623 = vmul.f32 %v541, 1.442695
  %v624 = vpow.pop %v623
  %v625 = vmul.f32 %v542, 1.442695
  %v626 = vpow.pop %v625
  %v627 = vmul.f32 %v543, 1.442695
  %v628 = vpow.pop %v627
  %v629 = vmul.f32 %v544, 1.442695
  %v630 = vpow.pop %v629
  %v631 = vmul.f32 %v545, 1.442695
  %v632 = vpow.pop %v631
  %v633 = vmul.f32 %v546, 1.442695
  %v634 = vpow.pop %v633
  %v635 = vmul.f32 %v547, 1.442695
  %v636 = vpow.pop %v635
  %v637 = vmul.f32 %v548, 1.442695
  %v638 = vpow.pop %v637
  %v639 = vmul.f32 %v549, 1.442695
  %v640 = vpow.pop %v639
  %v641 = vmul.f32 %v550, 1.442695
  %v642 = vpow.pop %v641
  %v643 = vmul.f32 %v551, 1.442695
  %v644 = vpow.pop %v643
  %v645 = vmul.f32 %v552, 1.442695
  %v646 = vpow.pop %v645
  %v647 = vmul.f32 %v553, 1.442695
  %v648 = vpow.pop %v647
  %v649 = vmul.f32 %v554, 1.442695
  %v650 = vpow.pop %v649
  %v651 = vmul.f32 %v555, 1.442695
  %v652 = vpow.pop %v651
  %v653 = vmul.f32 %v556, 1.442695
  %v654 = vpow.pop %v653
  %v655 = vmul.f32 %v557, 1.442695
  %v656 = vpow.pop %v655
  %v657 = vmul.f32 %v558, 1.442695
  %v658 = vpow.pop %v657
  %v659 = vmul.f32 %v559, 1.442695
  %v660 = vpow.pop %v659
  %v661 = vmul.f32 %v560, 1.442695
  %v662 = vpow.pop %v661
  %v663 = vmul.f32 %v561, 1.442695
  %v664 = vpow.pop %v663
  %v665 = vmul.f32 %v562, 1.442695
  %v666 = vpow.pop %v665
  %v667 = vmul.f32 %v563, 1.442695
  %v668 = vpow.pop %v667
  %v669 = vmul.f32 %v564, 1.442695
  %v670 = vpow.pop %v669
  %v671 = vmul.f32 %v565, 1.442695
  %v672 = vpow.pop %v671
  %v673 = vmul.f32 %v566, 1.442695
  %v674 = vpow.pop %v673
  %v675 = vmul.f32 %v567, 1.442695
  %v676 = vpow.pop %v675
  %v677 = vmul.f32 %v568, 1.442695
  %v678 = vpow.pop %v677
  %v679 = vmul.f32 %v569, 1.442695
  %v680 = vpow.pop %v679
  %v681 = vmul.f32 %v570, 1.442695
  %v682 = vpow.pop %v681
  %v683 = vadd.f32 %v572, 1.0
  %v684 = vadd.f32 %v574, 1.0
  %v685 = vadd.f32 %v576, 1.0
  %v686 = vadd.f32 %v578, 1.0
  %v687 = vadd.f32 %v580, 1.0
  %v688 = vadd.f32 %v582, 1.0
  %v689 = vadd.f32 %v584, 1.0
  %v690 = vadd.f32 %v586, 1.0
  %v691 = vadd.f32 %v588, 1.0
  %v692 = vadd.f32 %v590, 1.0
  %v693 = vadd.f32 %v592, 1.0
  %v694 = vadd.f32 %v594, 1.0
  %v695 = vadd.f32 %v596, 1.0
  %v696 = vadd.f32 %v598, 1.0
  %v697 = vadd.f32 %v600, 1.0
  %v698 = vadd.f32 %v602, 1.0
  %v699 = vadd.f32 %v604, 1.0
  %v700 = vadd.f32 %v606, 1.0
  %v701 = vadd.f32 %v608, 1.0
  %v702 = vadd.f32 %v610, 1.0
  %v703 = vadd.f32 %v612, 1.0
  %v704 = vadd.f32 %v614, 1.0
  %v705 = vadd.f32 %v616, 1.0
  %v706 = vadd.f32 %v618, 1.0
  %v707 = vadd.f32 %v620, 1.0
  %v708 = vadd.f32 %v622, 1.0
  %v709 = vadd.f32 %v624, 1.0
  %v710 = vadd.f32 %v626, 1.0
  %v711 = vadd.f32 %v628, 1.0
  %v712 = vadd.f32 %v630, 1.0
  %v713 = vadd.f32 %v632, 1.0
  %v714 = vadd.f32 %v634, 1.0
  %v715 = vadd.f32 %v636, 1.0
  %v716 = vadd.f32 %v638, 1.0
  %v717 = vadd.f32 %v640, 1.0
  %v718 = vadd.f32 %v642, 1.0
  %v719 = vadd.f32 %v644, 1.0
  %v720 = vadd.f32 %v646, 1.0
  %v721 = vadd.f32 %v648, 1.0
  %v722 = vadd.f32 %v650, 1.0
  %v723 = vadd.f32 %v652, 1.0
  %v724 = vadd.f32 %v654, 1.0
  %v725 = vadd.f32 %v656, 1.0
  %v726 = vadd.f32 %v658, 1.0
  %v727 = vadd.f32 %v660, 1.0
  %v728 = vadd.f32 %v662, 1.0
  %v729 = vadd.f32 %v664, 1.0
  %v730 = vadd.f32 %v666, 1.0
  %v731 = vadd.f32 %v668, 1.0
  %v732 = vadd.f32 %v670, 1.0
  %v733 = vadd.f32 %v672, 1.0
  %v734 = vadd.f32 %v674, 1.0
  %v735 = vadd.f32 %v676, 1.0
  %v736 = vadd.f32 %v678, 1.0
  %v737 = vadd.f32 %v680, 1.0
  %v738 = vadd.f32 %v682, 1.0
  %v739 = vrcp.pop %v683
  %v740 = vrcp.pop %v684
  %v741 = vrcp.pop %v685
  %v742 = vrcp.pop %v686
  %v743 = vrcp.pop %v687
  %v744 = vrcp.pop %v688
  %v745 = vrcp.pop %v689
  %v746 = vrcp.pop %v690
  %v747 = vrcp.pop %v691
  %v748 = vrcp.pop %v692
  %v749 = vrcp.pop %v693
  %v750 = vrcp.pop %v694
  %v751 = vrcp.pop %v695
  %v752 = vrcp.pop %v696
  %v753 = vrcp.pop %v697
  %v754 = vrcp.pop %v698
  %v755 = vrcp.pop %v699
  %v756 = vrcp.pop %v700
  %v757 = vrcp.pop %v701
  %v758 = vrcp.pop %v702
  %v759 = vrcp.pop %v703
  %v760 = vrcp.pop %v704
  %v761 = vrcp.pop %v705
  %v762 = vrcp.pop %v706
  %v763 = vrcp.pop %v707
  %v764 = vrcp.pop %v708
  %v765 = vrcp.pop %v709
  %v766 = vrcp.pop %v710
  %v767 = vrcp.pop %v711
  %v768 = vrcp.pop %v712
  %v769 = vrcp.pop %v713
  %v770 = vrcp.pop %v714
  %v771 = vrcp.pop %v715
  %v772 = vrcp.pop %v716
  %v773 = vrcp.pop %v717
  %v774 = vrcp.pop %v718
  %v775 = vrcp.pop %v719
  %v776 = vrcp.pop %v720
  %v777 = vrcp.pop %v721
  %v778 = vrcp.pop %v722
  %v779 = vrcp.pop %v723
  %v780 = vrcp.pop %v724
  %v781 = vrcp.pop %v725
  %v782 = vrcp.pop %v726
  %v783 = vrcp.pop %v727
  %v784 = vrcp.pop %v728
  %v785 = vrcp.pop %v729
  %v786 = vrcp.pop %v730
  %v787 = vrcp.pop %v731
  %v788 = vrcp.pop %v732
  %v789 = vrcp.pop %v733
  %v790 = vrcp.pop %v734
  %v791 = vrcp.pop %v735
  %v792 = vrcp.pop %v736
  %v793 = vrcp.pop %v737
  %v794 = vrcp.pop %v738
  %v795 = vpack.c.bf16 %v741, %v739
  %v796 = vpack.c.bf16 %v742, %v740
  %v797 = vpack.c.bf16 %v745, %v743
  %v798 = vpack.c.bf16 %v746, %v744
  %v799 = vpack.c.bf16 %v749, %v747
  %v800 = vpack.c.bf16 %v750, %v748
  %v801 = vpack.c.bf16 %v753, %v751
  %v802 = vpack.c.bf16 %v754, %v752
  %v803 = vpack.c.bf16 %v757, %v755
  %v804 = vpack.c.bf16 %v758, %v756
  %v805 = vpack.c.bf16 %v761, %v759
  %v806 = vpack.c.bf16 %v762, %v760
  %v807 = vpack.c.bf16 %v765, %v763
  %v808 = vpack.c.bf16 %v766, %v764
  %v809 = vpack.c.bf16 %v769, %v767
  %v810 = vpack.c.bf16 %v770, %v768
  %v811 = vpack.c.bf16 %v773, %v771
  %v812 = vpack.c.bf16 %v774, %v772
  %v813 = vpack.c.bf16 %v777, %v775
  %v814 = vpack.c.bf16 %v778, %v776
  %v815 = vpack.c.bf16 %v781, %v779
  %v816 = vpack.c.bf16 %v782, %v780
  %v817 = vpack.c.bf16 %v785, %v783
  %v818 = vpack.c.bf16 %v786, %v784
  %v819 = vpack.c.bf16 %v789, %v787
  %v820 = vpack.c.bf16 %v790, %v788
  %v821 = vpack.c.bf16 %v793, %v791
  %v822 = vpack.c.bf16 %v794, %v792
  %v823 = vld [vmem:[%s1 + $0xa0] sm:$0xf]
  %v824 = vld [vmem:[%s1 + $0xa8] sm:$0xf]
  %v825 = vld [vmem:[%s1 + $0xb0] sm:$0xf]
  %v826 = vld [vmem:[%s1 + $0xb8] sm:$0xf]
  %v827 = vld [vmem:[%s1 + $0xc0] sm:$0xf]
  %v828 = vld [vmem:[%s1 + $0xc8] sm:$0xf]
  %v829 = vld [vmem:[%s1 + $0xd0] sm:$0xf]
  %v830 = vld [vmem:[%s1 + $0xd8] sm:$0xf]
  %v831 = vld [vmem:[%s1 + $0xe0] sm:$0xf]
  %v832 = vld [vmem:[%s1 + $0xe8] sm:$0xf]
  %v833 = vld [vmem:[%s1 + $0xf0] sm:$0xf]
  %v834 = vld [vmem:[%s1 + $0xf8] sm:$0xf]
  %v835 = vld [vmem:[%s1 + $0x100] sm:$0xf]
  %v836 = vld [vmem:[%s1 + $0x108] sm:$0xf]
  %v837 = vld [vmem:[%s1 + $0x110] sm:$0xf]
  %v838 = vld [vmem:[%s1 + $0x118] sm:$0xf]
  %v839 = vld [vmem:[%s1 + $0x120] sm:$0xf]
  %v840 = vld [vmem:[%s1 + $0x128] sm:$0xf]
  %v841 = vld [vmem:[%s1 + $0x130] sm:$0xf]
  %v842 = vld [vmem:[%s1 + $0x138] sm:$0xf]
  %v843 = vld [vmem:[%s1 + $0x140] sm:$0xf]
  %v865 = vunpack.c.l.b16 %v823
  %v866 = vunpack.c.l.b16 %v824
  %v867 = vunpack.c.l.b16 %v825
  %v868 = vunpack.c.l.b16 %v826
  %v869 = vunpack.c.l.b16 %v827
  %v870 = vunpack.c.l.b16 %v828
  %v871 = vunpack.c.l.b16 %v829
  %v872 = vunpack.c.l.b16 %v830
  %v873 = vunpack.c.l.b16 %v831
  %v874 = vunpack.c.l.b16 %v832
  %v875 = vunpack.c.l.b16 %v833
  %v876 = vunpack.c.l.b16 %v834
  %v877 = vunpack.c.l.b16 %v835
  %v878 = vunpack.c.l.b16 %v836
  %v879 = vunpack.c.l.b16 %v837
  %v880 = vunpack.c.l.b16 %v838
  %v881 = vunpack.c.l.b16 %v839
  %v882 = vunpack.c.l.b16 %v840
  %v883 = vunpack.c.l.b16 %v841
  %v884 = vunpack.c.l.b16 %v842
  %v885 = vunpack.c.l.b16 %v843
  %v886 = vpack.c.b16 %v866, %v865
  %v887 = vpack.c.b16 %v868, %v867
  %v888 = vpack.c.b16 %v870, %v869
  %v889 = vpack.c.b16 %v872, %v871
  %v890 = vpack.c.b16 %v874, %v873
  %v891 = vpack.c.b16 %v876, %v875
  %v892 = vpack.c.b16 %v878, %v877
  %v893 = vpack.c.b16 %v880, %v879
  %v894 = vpack.c.b16 %v882, %v881
  %v895 = vpack.c.b16 %v884, %v883
  %v896 = vpack.c.b16 %v885, %v885
  %vm907 = vcmask 326656
  %v909 = vsel %vm907, %v796, 0
  %v912 = vsel %vm907, %v798, 0
  %v915 = vsel %vm907, %v800, 0
  %v918 = vsel %vm907, %v802, 0
  %v921 = vsel %vm907, %v804, 0
  %v924 = vsel %vm907, %v806, 0
  %v927 = vsel %vm907, %v808, 0
  %v930 = vsel %vm907, %v810, 0
  %v933 = vsel %vm907, %v812, 0
  %v936 = vsel %vm907, %v814, 0
  %v939 = vsel %vm907, %v816, 0
  %v942 = vsel %vm907, %v818, 0
  %v945 = vsel %vm907, %v820, 0
  %v948 = vsel %vm907, %v822, 0
  %vm950 = vcmask 1043456
  %v952 = vsel %vm950, %v896, 0
  %954 = vmatprep.subr.bf16.mxu0 0
  %955 = vmatpush1.bf16.msra.mxu0 %v886
  %956 = vmatprep.subr.bf16.mxu0 0
  %957 = vmatpush1.bf16.msra.mxu0 %v887
  %958 = vmatprep.subr.bf16.mxu0 0
  %959 = vmatpush1.bf16.msra.mxu0 %v888
  %960 = vmatprep.subr.bf16.mxu0 0
  %961 = vmatpush1.bf16.msra.mxu0 %v889
  %962 = vmatprep.subr.bf16.mxu0 0
  %963 = vmatpush1.bf16.msra.mxu0 %v890
  %964 = vmatprep.subr.bf16.mxu0 0
  %965 = vmatpush1.bf16.msra.mxu0 %v891
  %966 = vmatprep.subr.bf16.mxu0 0
  %967 = vmatpush1.bf16.msra.mxu0 %v892
  %968 = vmatprep.subr.bf16.mxu0 0
  %969 = vmatpush1.bf16.msra.mxu0 %v893
  %970 = vmatprep.subr.bf16.mxu0 0
  %971 = vmatpush1.bf16.msra.mxu0 %v894
  %972 = vmatprep.subr.bf16.mxu0 0
  %973 = vmatpush1.bf16.msra.mxu0 %v895
  %974 = vmatprep.subr.bf16.mxu0 0
  %975 = vmatpush1.bf16.msra.mxu0 %v952
  %976 = vmatprep.subr.bf16.mxu0 0
  %977 = vmatpush1.bf16.msra.mxu0 0
  %978 = vmatprep.subr.bf16.mxu0 0
  %979 = vmatpush1.bf16.msra.mxu0 0
  %980 = vmatprep.subr.bf16.mxu0 0
  %981 = vmatpush1.bf16.msra.mxu0 0
  %982 = vmatprep.subr.bf16.mxu0 0
  %983 = vmatpush1.bf16.msra.mxu0 0
  %984 = vmatprep.subr.bf16.mxu0 0
  %985 = vmatpush1.bf16.msra.mxu0 0
  %986 = vmatprep.mubr.bf16.mxu0 %v909
  %987 = vmatmul.mubr.bf16.gmra.mrb[0].mxu0 %v795
  %v988 = vpop.f32.mrb[0].mxu0
  %v989 = vadd.f32 0.0, %v988
  %v990 = vpop.f32.mrb[0].mxu0
  %v991 = vpop.f32.mrb[0].mxu0
  %v992 = vadd.f32 0.0, %v991
  %v993 = vpop.f32.mrb[0].mxu0
  %994 = vmatprep.mubr.bf16.mxu0 %v912
  %995 = vmatmul.mubr.bf16.gmra.mrb[0].mxu0 %v797
  %v996 = vpop.f32.mrb[0].mxu0
  %v997 = vadd.f32 0.0, %v996
  %v998 = vpop.f32.mrb[0].mxu0
  %v999 = vpop.f32.mrb[0].mxu0
  %v1000 = vadd.f32 0.0, %v999
  %v1001 = vpop.f32.mrb[0].mxu0
  %1002 = vmatprep.mubr.bf16.mxu0 %v915
  %1003 = vmatmul.mubr.bf16.gmra.mrb[0].mxu0 %v799
  %v1004 = vpop.f32.mrb[0].mxu0
  %v1005 = vadd.f32 0.0, %v1004
  %v1006 = vpop.f32.mrb[0].mxu0
  %v1007 = vpop.f32.mrb[0].mxu0
  %v1008 = vadd.f32 0.0, %v1007
  %v1009 = vpop.f32.mrb[0].mxu0
  %1010 = vmatprep.mubr.bf16.mxu0 %v918
  %1011 = vmatmul.mubr.bf16.gmra.mrb[0].mxu0 %v801
  %v1012 = vpop.f32.mrb[0].mxu0
  %v1013 = vadd.f32 0.0, %v1012
  %v1014 = vpop.f32.mrb[0].mxu0
  %v1015 = vpop.f32.mrb[0].mxu0
  %v1016 = vadd.f32 0.0, %v1015
  %v1017 = vpop.f32.mrb[0].mxu0
  %1018 = vmatprep.mubr.bf16.mxu0 %v921
  %1019 = vmatmul.mubr.bf16.gmra.mrb[0].mxu0 %v803
  %v1020 = vpop.f32.mrb[0].mxu0
  %v1021 = vadd.f32 0.0, %v1020
  %v1022 = vpop.f32.mrb[0].mxu0
  %v1023 = vpop.f32.mrb[0].mxu0
  %v1024 = vadd.f32 0.0, %v1023
  %v1025 = vpop.f32.mrb[0].mxu0
  %1026 = vmatprep.mubr.bf16.mxu0 %v924
  %1027 = vmatmul.mubr.bf16.gmra.mrb[0].mxu0 %v805
  %v1028 = vpop.f32.mrb[0].mxu0
  %v1029 = vadd.f32 0.0, %v1028
  %v1030 = vpop.f32.mrb[0].mxu0
  %v1031 = vpop.f32.mrb[0].mxu0
  %v1032 = vadd.f32 0.0, %v1031
  %v1033 = vpop.f32.mrb[0].mxu0
  %1034 = vmatprep.mubr.bf16.mxu0 %v927
  %1035 = vmatmul.mubr.bf16.gmra.mrb[0].mxu0 %v807
  %v1036 = vpop.f32.mrb[0].mxu0
  %v1037 = vadd.f32 0.0, %v1036
  %v1038 = vpop.f32.mrb[0].mxu0
  %v1039 = vpop.f32.mrb[0].mxu0
  %v1040 = vadd.f32 0.0, %v1039
  %v1041 = vpop.f32.mrb[0].mxu0
  %1042 = vmatprep.mubr.bf16.mxu0 %v930
  %1043 = vmatmul.mubr.bf16.gmra.mrb[0].mxu0 %v809
  %v1044 = vpop.f32.mrb[0].mxu0
  %v1045 = vadd.f32 0.0, %v1044
  %v1046 = vpop.f32.mrb[0].mxu0
  %v1047 = vpop.f32.mrb[0].mxu0
  %v1048 = vadd.f32 0.0, %v1047
  %v1049 = vpop.f32.mrb[0].mxu0
  %1050 = vmatprep.mubr.bf16.mxu0 %v933
  %1051 = vmatmul.mubr.bf16.gmra.mrb[0].mxu0 %v811
  %v1052 = vpop.f32.mrb[0].mxu0
  %v1053 = vadd.f32 0.0, %v1052
  %v1054 = vpop.f32.mrb[0].mxu0
  %v1055 = vpop.f32.mrb[0].mxu0
  %v1056 = vadd.f32 0.0, %v1055
  %v1057 = vpop.f32.mrb[0].mxu0
  %1058 = vmatprep.mubr.bf16.mxu0 %v936
  %1059 = vmatmul.mubr.bf16.gmra.mrb[0].mxu0 %v813
  %v1060 = vpop.f32.mrb[0].mxu0
  %v1061 = vadd.f32 0.0, %v1060
  %v1062 = vpop.f32.mrb[0].mxu0
  %v1063 = vpop.f32.mrb[0].mxu0
  %v1064 = vadd.f32 0.0, %v1063
  %v1065 = vpop.f32.mrb[0].mxu0
  %1066 = vmatprep.mubr.bf16.mxu0 %v939
  %1067 = vmatmul.mubr.bf16.gmra.mrb[0].mxu0 %v815
  %v1068 = vpop.f32.mrb[0].mxu0
  %v1069 = vadd.f32 0.0, %v1068
  %v1070 = vpop.f32.mrb[0].mxu0
  %v1071 = vpop.f32.mrb[0].mxu0
  %v1072 = vadd.f32 0.0, %v1071
  %v1073 = vpop.f32.mrb[0].mxu0
  %1074 = vmatprep.mubr.bf16.mxu0 %v942
  %1075 = vmatmul.mubr.bf16.gmra.mrb[0].mxu0 %v817
  %v1076 = vpop.f32.mrb[0].mxu0
  %v1077 = vadd.f32 0.0, %v1076
  %v1078 = vpop.f32.mrb[0].mxu0
  %v1079 = vpop.f32.mrb[0].mxu0
  %v1080 = vadd.f32 0.0, %v1079
  %v1081 = vpop.f32.mrb[0].mxu0
  %1082 = vmatprep.mubr.bf16.mxu0 %v945
  %1083 = vmatmul.mubr.bf16.gmra.mrb[0].mxu0 %v819
  %v1084 = vpop.f32.mrb[0].mxu0
  %v1085 = vadd.f32 0.0, %v1084
  %v1086 = vpop.f32.mrb[0].mxu0
  %v1087 = vpop.f32.mrb[0].mxu0
  %v1088 = vadd.f32 0.0, %v1087
  %v1089 = vpop.f32.mrb[0].mxu0
  %1090 = vmatprep.mubr.bf16.mxu0 %v948
  %1091 = vmatmul.mubr.bf16.gmra.mrb[0].mxu0 %v821
  %v1092 = vpop.f32.mrb[0].mxu0
  %v1093 = vadd.f32 0.0, %v1092
  %v1094 = vpop.f32.mrb[0].mxu0
  %v1095 = vpop.f32.mrb[0].mxu0
  %v1096 = vadd.f32 0.0, %v1095
  %v1097 = vpop.f32.mrb[0].mxu0
  %1098 = vdwg.mxu0
  %v1099 = vadd.f32 %v989, %v1045
  %v1100 = vadd.f32 %v992, %v1048
  %v1101 = vadd.f32 %v997, %v1053
  %v1102 = vadd.f32 %v1000, %v1056
  %v1103 = vadd.f32 %v1005, %v1061
  %v1104 = vadd.f32 %v1008, %v1064
  %v1105 = vadd.f32 %v1013, %v1069
  %v1106 = vadd.f32 %v1016, %v1072
  %v1107 = vadd.f32 %v1021, %v1077
  %v1108 = vadd.f32 %v1024, %v1080
  %v1109 = vadd.f32 %v1029, %v1085
  %v1110 = vadd.f32 %v1032, %v1088
  %v1111 = vadd.f32 %v1037, %v1093
  %v1112 = vadd.f32 %v1040, %v1096
  %v1113 = vmul.f32 %v1099, 0.5
  %v1114 = vmul.f32 %v1100, 0.5
  %v1115 = vmul.f32 %v1101, 0.5
  %v1116 = vmul.f32 %v1102, 0.5
  %v1117 = vmul.f32 %v1103, 0.5
  %v1118 = vmul.f32 %v1104, 0.5
  %v1119 = vmul.f32 %v1105, 0.5
  %v1120 = vmul.f32 %v1106, 0.5
  %v1121 = vmul.f32 %v1107, 0.5
  %v1122 = vmul.f32 %v1108, 0.5
  %v1123 = vmul.f32 %v1109, 0.5
  %v1124 = vmul.f32 %v1110, 0.5
  %v1125 = vmul.f32 %v1111, 0.5
  %v1126 = vmul.f32 %v1112, 0.5
  %v1127 = vpack.c.bf16 %v1114, %v1113
  %v1128 = vpack.c.bf16 %v1116, %v1115
  %v1129 = vpack.c.bf16 %v1118, %v1117
  %v1130 = vpack.c.bf16 %v1120, %v1119
  %v1131 = vpack.c.bf16 %v1122, %v1121
  %v1132 = vpack.c.bf16 %v1124, %v1123
  %v1133 = vpack.c.bf16 %v1126, %v1125
  %vm1140 = vcmask 1043456
  %v1141 = vrot.slane %v1127, 4
  %v1142 = vrot.slane %v1128, 4
  %v1143 = vsel %vm1140, %v1141, %v1142
  %v1144 = vrot.slane %v1129, 4
  %v1145 = vsel %vm1140, %v1142, %v1144
  %v1146 = vrot.slane %v1130, 4
  %v1147 = vsel %vm1140, %v1144, %v1146
  %v1148 = vrot.slane %v1131, 4
  %v1149 = vsel %vm1140, %v1146, %v1148
  %v1150 = vrot.slane %v1132, 4
  %v1151 = vsel %vm1140, %v1148, %v1150
  %v1158 = vrot.slane %v1133, 4
  %v1159 = vsel %vm1140, %v1150, %v1158
  %v1161 = vld [vmem:[%s1 + $0x148] sm:$0xff]
  %v1162 = vld [vmem:[%s1 + $0x150] sm:$0xff]
  %v1163 = vld [vmem:[%s1 + $0x158] sm:$0xff]
  %v1164 = vld [vmem:[%s1 + $0x160] sm:$0xff]
  %v1165 = vld [vmem:[%s1 + $0x168] sm:$0xff]
  %v1166 = vld [vmem:[%s1 + $0x170] sm:$0xff]
  %v1167 = vld [vmem:[%s1 + $0x178] sm:$0xff]
  %v1168 = vld [vmem:[%s1 + $0x180] sm:$0xff]
  %v1169 = vld [vmem:[%s1 + $0x188] sm:$0xff]
  %v1170 = vld [vmem:[%s1 + $0x190] sm:$0xff]
  %v1171 = vld [vmem:[%s1 + $0x198] sm:$0xff]
  %v1172 = vld [vmem:[%s1 + $0x1a0] sm:$0xff]
  %v1173 = vld [vmem:[%s1 + $0x1a8] sm:$0xff]
  %v1174 = vld [vmem:[%s1 + $0x1b0] sm:$0xff]
  %v1175 = vld [vmem:[%s1 + $0x1b8] sm:$0xff]
  %v1176 = vld [vmem:[%s1 + $0x1c0] sm:$0xff]
  %v1177 = vld [vmem:[%s1 + $0x1c8] sm:$0xff]
  %v1178 = vld [vmem:[%s1 + $0x1d0] sm:$0xff]
  %v1179 = vld [vmem:[%s1 + $0x1d8] sm:$0xff]
  %v1180 = vld [vmem:[%s1 + $0x1e0] sm:$0xff]
  %v1181 = vld [vmem:[%s1 + $0x1e8] sm:$0xff]
  %v1182 = vld [vmem:[%s1 + $0x1f0] sm:$0xff]
  %v1183 = vld [vmem:[%s1 + $0x1f8] sm:$0xff]
  %v1184 = vld [vmem:[%s1 + $0x200] sm:$0xff]
  %v1185 = vld [vmem:[%s1 + $0x208] sm:$0xff]
  %v1186 = vld [vmem:[%s1 + $0x210] sm:$0xff]
  %v1187 = vld [vmem:[%s1 + $0x218] sm:$0xff]
  %v1188 = vld [vmem:[%s1 + $0x220] sm:$0xff]
  %v1189 = vld [vmem:[%s1 + $0x228] sm:$0xff]
  %v1190 = vld [vmem:[%s1 + $0x230] sm:$0xff]
  %v1191 = vld [vmem:[%s1 + $0x238] sm:$0xff]
  %v1192 = vld [vmem:[%s1 + $0x240] sm:$0xff]
  %v1193 = vld [vmem:[%s1 + $0x248] sm:$0xff]
  %v1194 = vld [vmem:[%s1 + $0x250] sm:$0xff]
  %v1195 = vld [vmem:[%s1 + $0x258] sm:$0xff]
  %v1196 = vld [vmem:[%s1 + $0x260] sm:$0xff]
  %v1197 = vld [vmem:[%s1 + $0x268] sm:$0xff]
  %v1198 = vld [vmem:[%s1 + $0x270] sm:$0xff]
  %v1199 = vld [vmem:[%s1 + $0x278] sm:$0xff]
  %v1200 = vld [vmem:[%s1 + $0x280] sm:$0xff]
  %v1201 = vld [vmem:[%s1 + $0x288] sm:$0xff]
  %v1202 = vld [vmem:[%s1 + $0x290] sm:$0xff]
  %v1203 = vld [vmem:[%s1 + $0x298] sm:$0xff]
  %v1204 = vld [vmem:[%s1 + $0x2a0] sm:$0xff]
  %v1205 = vld [vmem:[%s1 + $0x2a8] sm:$0xff]
  %v1206 = vld [vmem:[%s1 + $0x2b0] sm:$0xff]
  %v1207 = vld [vmem:[%s1 + $0x2b8] sm:$0xff]
  %v1208 = vld [vmem:[%s1 + $0x2c0] sm:$0xff]
  %v1209 = vld [vmem:[%s1 + $0x2c8] sm:$0xff]
  %v1210 = vld [vmem:[%s1 + $0x2d0] sm:$0xff]
  %v1211 = vld [vmem:[%s1 + $0x2d8] sm:$0xff]
  %v1212 = vld [vmem:[%s1 + $0x2e0] sm:$0xff]
  %v1213 = vld [vmem:[%s1 + $0x2e8] sm:$0xff]
  %v1214 = vld [vmem:[%s1 + $0x2f0] sm:$0xff]
  %v1215 = vld [vmem:[%s1 + $0x2f8] sm:$0xff]
  %v1216 = vld [vmem:[%s1 + $0x300] sm:$0xff]
  %v1217 = vld [vmem:[%s1 + $0x308] sm:$0xff]
  %v1218 = vld [vmem:[%s1 + $0x310] sm:$0xff]
  %v1219 = vld [vmem:[%s1 + $0x318] sm:$0xff]
  %v1220 = vld [vmem:[%s1 + $0x320] sm:$0xff]
  %v1221 = vld [vmem:[%s1 + $0x328] sm:$0xff]
  %v1222 = vld [vmem:[%s1 + $0x330] sm:$0xff]
  %v1223 = vld [vmem:[%s1 + $0x338] sm:$0xff]
  %v1224 = vld [vmem:[%s1 + $0x340] sm:$0xff]
  %v1225 = vld [vmem:[%s1 + $0x348] sm:$0xff]
  %v1226 = vld [vmem:[%s1 + $0x350] sm:$0xff]
  %v1227 = vld [vmem:[%s1 + $0x358] sm:$0xff]
  %v1228 = vld [vmem:[%s1 + $0x360] sm:$0xff]
  %v1229 = vld [vmem:[%s1 + $0x368] sm:$0xff]
  %v1230 = vld [vmem:[%s1 + $0x370] sm:$0xff]
  %v1231 = vld [vmem:[%s1 + $0x378] sm:$0xff]
  %v1232 = vld [vmem:[%s1 + $0x380] sm:$0xff]
  %v1233 = vld [vmem:[%s1 + $0x388] sm:$0xff]
  %v1234 = vld [vmem:[%s1 + $0x390] sm:$0xff]
  %v1235 = vld [vmem:[%s1 + $0x398] sm:$0xff]
  %v1236 = vld [vmem:[%s1 + $0x3a0] sm:$0xff]
  %v1237 = vld [vmem:[%s1 + $0x3a8] sm:$0xff]
  %v1238 = vld [vmem:[%s1 + $0x3b0] sm:$0xff]
  %v1239 = vld [vmem:[%s1 + $0x3b8] sm:$0xff]
  %v1240 = vld [vmem:[%s1 + $0x3c0] sm:$0xff]
  %v1241 = vlaneseq
  %v1242 = vshrl.u32 %v1241, 7
  %v1243 = vsub.s32 1, %v1242
  %v1244 = vrot.slane %v15, %v1243
  %v1245 = vlaneseq
  %v1246 = vshrl.u32 %v1245, 7
  %v1247 = vsub.s32 1, %v1246
  %v1248 = vrot.slane %v16, %v1247
  %v1329 = vunpack.c.l.b16 %v1161
  %v1330 = vunpack.c.h.b16 %v1161
  %v1331 = vunpack.c.l.b16 %v1162
  %v1332 = vunpack.c.h.b16 %v1162
  %v1333 = vunpack.c.l.b16 %v1163
  %v1334 = vunpack.c.h.b16 %v1163
  %v1335 = vunpack.c.l.b16 %v1164
  %v1336 = vunpack.c.h.b16 %v1164
  %v1337 = vunpack.c.l.b16 %v1165
  %v1338 = vunpack.c.h.b16 %v1165
  %v1339 = vunpack.c.l.b16 %v1166
  %v1340 = vunpack.c.h.b16 %v1166
  %v1341 = vunpack.c.l.b16 %v1167
  %v1342 = vunpack.c.h.b16 %v1167
  %v1343 = vunpack.c.l.b16 %v1168
  %v1344 = vunpack.c.h.b16 %v1168
  %v1345 = vunpack.c.l.b16 %v1169
  %v1346 = vunpack.c.h.b16 %v1169
  %v1347 = vunpack.c.l.b16 %v1170
  %v1348 = vunpack.c.h.b16 %v1170
  %v1349 = vunpack.c.l.b16 %v1171
  %v1350 = vunpack.c.h.b16 %v1171
  %v1351 = vunpack.c.l.b16 %v1172
  %v1352 = vunpack.c.h.b16 %v1172
  %v1353 = vunpack.c.l.b16 %v1173
  %v1354 = vunpack.c.h.b16 %v1173
  %v1355 = vunpack.c.l.b16 %v1174
  %v1356 = vunpack.c.h.b16 %v1174
  %v1357 = vunpack.c.l.b16 %v1175
  %v1358 = vunpack.c.h.b16 %v1175
  %v1359 = vunpack.c.l.b16 %v1176
  %v1360 = vunpack.c.h.b16 %v1176
  %v1361 = vunpack.c.l.b16 %v1177
  %v1362 = vunpack.c.h.b16 %v1177
  %v1363 = vunpack.c.l.b16 %v1178
  %v1364 = vunpack.c.h.b16 %v1178
  %v1365 = vunpack.c.l.b16 %v1179
  %v1366 = vunpack.c.h.b16 %v1179
  %v1367 = vunpack.c.l.b16 %v1180
  %v1368 = vunpack.c.h.b16 %v1180
  %v1369 = vunpack.c.l.b16 %v1181
  %v1370 = vunpack.c.h.b16 %v1181
  %v1371 = vunpack.c.l.b16 %v1182
  %v1372 = vunpack.c.h.b16 %v1182
  %v1373 = vunpack.c.l.b16 %v1183
  %v1374 = vunpack.c.h.b16 %v1183
  %v1375 = vunpack.c.l.b16 %v1184
  %v1376 = vunpack.c.h.b16 %v1184
  %v1377 = vunpack.c.l.b16 %v1185
  %v1378 = vunpack.c.h.b16 %v1185
  %v1379 = vunpack.c.l.b16 %v1186
  %v1380 = vunpack.c.h.b16 %v1186
  %v1381 = vunpack.c.l.b16 %v1187
  %v1382 = vunpack.c.h.b16 %v1187
  %v1383 = vunpack.c.l.b16 %v1188
  %v1384 = vunpack.c.h.b16 %v1188
  %v1385 = vunpack.c.l.b16 %v1189
  %v1386 = vunpack.c.h.b16 %v1189
  %v1387 = vunpack.c.l.b16 %v1190
  %v1388 = vunpack.c.h.b16 %v1190
  %v1389 = vunpack.c.l.b16 %v1191
  %v1390 = vunpack.c.h.b16 %v1191
  %v1391 = vunpack.c.l.b16 %v1192
  %v1392 = vunpack.c.h.b16 %v1192
  %v1393 = vunpack.c.l.b16 %v1193
  %v1394 = vunpack.c.h.b16 %v1193
  %v1395 = vunpack.c.l.b16 %v1194
  %v1396 = vunpack.c.h.b16 %v1194
  %v1397 = vunpack.c.l.b16 %v1195
  %v1398 = vunpack.c.h.b16 %v1195
  %v1399 = vunpack.c.l.b16 %v1196
  %v1400 = vunpack.c.h.b16 %v1196
  %v1401 = vunpack.c.l.b16 %v1197
  %v1402 = vunpack.c.h.b16 %v1197
  %v1403 = vunpack.c.l.b16 %v1198
  %v1404 = vunpack.c.h.b16 %v1198
  %v1405 = vunpack.c.l.b16 %v1199
  %v1406 = vunpack.c.h.b16 %v1199
  %v1407 = vunpack.c.l.b16 %v1200
  %v1408 = vunpack.c.h.b16 %v1200
  %v1409 = vunpack.c.l.b16 %v1201
  %v1410 = vunpack.c.h.b16 %v1201
  %v1411 = vunpack.c.l.b16 %v1202
  %v1412 = vunpack.c.h.b16 %v1202
  %v1413 = vunpack.c.l.b16 %v1203
  %v1414 = vunpack.c.h.b16 %v1203
  %v1415 = vunpack.c.l.b16 %v1204
  %v1416 = vunpack.c.h.b16 %v1204
  %v1417 = vunpack.c.l.b16 %v1205
  %v1418 = vunpack.c.h.b16 %v1205
  %v1419 = vunpack.c.l.b16 %v1206
  %v1420 = vunpack.c.h.b16 %v1206
  %v1421 = vunpack.c.l.b16 %v1207
  %v1422 = vunpack.c.h.b16 %v1207
  %v1423 = vunpack.c.l.b16 %v1208
  %v1424 = vunpack.c.h.b16 %v1208
  %v1425 = vunpack.c.l.b16 %v1209
  %v1426 = vunpack.c.h.b16 %v1209
  %v1427 = vunpack.c.l.b16 %v1210
  %v1428 = vunpack.c.h.b16 %v1210
  %v1429 = vunpack.c.l.b16 %v1211
  %v1430 = vunpack.c.h.b16 %v1211
  %v1431 = vunpack.c.l.b16 %v1212
  %v1432 = vunpack.c.h.b16 %v1212
  %v1433 = vunpack.c.l.b16 %v1213
  %v1434 = vunpack.c.h.b16 %v1213
  %v1435 = vunpack.c.l.b16 %v1214
  %v1436 = vunpack.c.h.b16 %v1214
  %v1437 = vunpack.c.l.b16 %v1215
  %v1438 = vunpack.c.h.b16 %v1215
  %v1439 = vunpack.c.l.b16 %v1216
  %v1440 = vunpack.c.h.b16 %v1216
  %v1441 = vunpack.c.l.b16 %v1217
  %v1442 = vunpack.c.h.b16 %v1217
  %v1443 = vunpack.c.l.b16 %v1218
  %v1444 = vunpack.c.h.b16 %v1218
  %v1445 = vunpack.c.l.b16 %v1219
  %v1446 = vunpack.c.h.b16 %v1219
  %v1447 = vunpack.c.l.b16 %v1220
  %v1448 = vunpack.c.h.b16 %v1220
  %v1449 = vunpack.c.l.b16 %v1221
  %v1450 = vunpack.c.h.b16 %v1221
  %v1451 = vunpack.c.l.b16 %v1222
  %v1452 = vunpack.c.h.b16 %v1222
  %v1453 = vunpack.c.l.b16 %v1223
  %v1454 = vunpack.c.h.b16 %v1223
  %v1455 = vunpack.c.l.b16 %v1224
  %v1456 = vunpack.c.h.b16 %v1224
  %v1457 = vunpack.c.l.b16 %v1225
  %v1458 = vunpack.c.h.b16 %v1225
  %v1459 = vunpack.c.l.b16 %v1226
  %v1460 = vunpack.c.h.b16 %v1226
  %v1461 = vunpack.c.l.b16 %v1227
  %v1462 = vunpack.c.h.b16 %v1227
  %v1463 = vunpack.c.l.b16 %v1228
  %v1464 = vunpack.c.h.b16 %v1228
  %v1465 = vunpack.c.l.b16 %v1229
  %v1466 = vunpack.c.h.b16 %v1229
  %v1467 = vunpack.c.l.b16 %v1230
  %v1468 = vunpack.c.h.b16 %v1230
  %v1469 = vunpack.c.l.b16 %v1231
  %v1470 = vunpack.c.h.b16 %v1231
  %v1471 = vunpack.c.l.b16 %v1232
  %v1472 = vunpack.c.h.b16 %v1232
  %v1473 = vunpack.c.l.b16 %v1233
  %v1474 = vunpack.c.h.b16 %v1233
  %v1475 = vunpack.c.l.b16 %v1234
  %v1476 = vunpack.c.h.b16 %v1234
  %v1477 = vunpack.c.l.b16 %v1235
  %v1478 = vunpack.c.h.b16 %v1235
  %v1479 = vunpack.c.l.b16 %v1236
  %v1480 = vunpack.c.h.b16 %v1236
  %v1481 = vunpack.c.l.b16 %v1237
  %v1482 = vunpack.c.h.b16 %v1237
  %v1483 = vunpack.c.l.b16 %v1238
  %v1484 = vunpack.c.h.b16 %v1238
  %v1485 = vunpack.c.l.b16 %v1239
  %v1486 = vunpack.c.h.b16 %v1239
  %v1487 = vunpack.c.l.b16 %v1240
  %v1488 = vunpack.c.h.b16 %v1240
  %v1489 = vpack.c.b16 %v1331, %v1329
  %v1490 = vpack.c.b16 %v1332, %v1330
  %v1491 = vpack.c.b16 %v1335, %v1333
  %v1492 = vpack.c.b16 %v1336, %v1334
  %v1493 = vpack.c.b16 %v1339, %v1337
  %v1494 = vpack.c.b16 %v1340, %v1338
  %v1495 = vpack.c.b16 %v1343, %v1341
  %v1496 = vpack.c.b16 %v1344, %v1342
  %v1497 = vpack.c.b16 %v1347, %v1345
  %v1498 = vpack.c.b16 %v1348, %v1346
  %v1499 = vpack.c.b16 %v1351, %v1349
  %v1500 = vpack.c.b16 %v1352, %v1350
  %v1501 = vpack.c.b16 %v1355, %v1353
  %v1502 = vpack.c.b16 %v1356, %v1354
  %v1503 = vpack.c.b16 %v1359, %v1357
  %v1504 = vpack.c.b16 %v1360, %v1358
  %v1505 = vpack.c.b16 %v1363, %v1361
  %v1506 = vpack.c.b16 %v1364, %v1362
  %v1507 = vpack.c.b16 %v1367, %v1365
  %v1508 = vpack.c.b16 %v1368, %v1366
  %v1509 = vpack.c.b16 %v1371, %v1369
  %v1510 = vpack.c.b16 %v1372, %v1370
  %v1511 = vpack.c.b16 %v1375, %v1373
  %v1512 = vpack.c.b16 %v1376, %v1374
  %v1513 = vpack.c.b16 %v1379, %v1377
  %v1514 = vpack.c.b16 %v1380, %v1378
  %v1515 = vpack.c.b16 %v1383, %v1381
  %v1516 = vpack.c.b16 %v1384, %v1382
  %v1517 = vpack.c.b16 %v1387, %v1385
  %v1518 = vpack.c.b16 %v1388, %v1386
  %v1519 = vpack.c.b16 %v1391, %v1389
  %v1520 = vpack.c.b16 %v1392, %v1390
  %v1521 = vpack.c.b16 %v1395, %v1393
  %v1522 = vpack.c.b16 %v1396, %v1394
  %v1523 = vpack.c.b16 %v1399, %v1397
  %v1524 = vpack.c.b16 %v1400, %v1398
  %v1525 = vpack.c.b16 %v1403, %v1401
  %v1526 = vpack.c.b16 %v1404, %v1402
  %v1527 = vpack.c.b16 %v1407, %v1405
  %v1528 = vpack.c.b16 %v1408, %v1406
  %v1529 = vpack.c.b16 %v1411, %v1409
  %v1530 = vpack.c.b16 %v1412, %v1410
  %v1531 = vpack.c.b16 %v1415, %v1413
  %v1532 = vpack.c.b16 %v1416, %v1414
  %v1533 = vpack.c.b16 %v1419, %v1417
  %v1534 = vpack.c.b16 %v1420, %v1418
  %v1535 = vpack.c.b16 %v1423, %v1421
  %v1536 = vpack.c.b16 %v1424, %v1422
  %v1537 = vpack.c.b16 %v1427, %v1425
  %v1538 = vpack.c.b16 %v1428, %v1426
  %v1539 = vpack.c.b16 %v1431, %v1429
  %v1540 = vpack.c.b16 %v1432, %v1430
  %v1541 = vpack.c.b16 %v1435, %v1433
  %v1542 = vpack.c.b16 %v1436, %v1434
  %v1543 = vpack.c.b16 %v1439, %v1437
  %v1544 = vpack.c.b16 %v1440, %v1438
  %v1545 = vpack.c.b16 %v1443, %v1441
  %v1546 = vpack.c.b16 %v1444, %v1442
  %v1547 = vpack.c.b16 %v1447, %v1445
  %v1548 = vpack.c.b16 %v1448, %v1446
  %v1549 = vpack.c.b16 %v1451, %v1449
  %v1550 = vpack.c.b16 %v1452, %v1450
  %v1551 = vpack.c.b16 %v1455, %v1453
  %v1552 = vpack.c.b16 %v1456, %v1454
  %v1553 = vpack.c.b16 %v1459, %v1457
  %v1554 = vpack.c.b16 %v1460, %v1458
  %v1555 = vpack.c.b16 %v1463, %v1461
  %v1556 = vpack.c.b16 %v1464, %v1462
  %v1557 = vpack.c.b16 %v1467, %v1465
  %v1558 = vpack.c.b16 %v1468, %v1466
  %v1559 = vpack.c.b16 %v1471, %v1469
  %v1560 = vpack.c.b16 %v1472, %v1470
  %v1561 = vpack.c.b16 %v1475, %v1473
  %v1562 = vpack.c.b16 %v1476, %v1474
  %v1563 = vpack.c.b16 %v1479, %v1477
  %v1564 = vpack.c.b16 %v1480, %v1478
  %v1565 = vpack.c.b16 %v1483, %v1481
  %v1566 = vpack.c.b16 %v1484, %v1482
  %v1567 = vpack.c.b16 %v1487, %v1485
  %v1568 = vpack.c.b16 %v1488, %v1486
  %1649 = vmatprep.subr.bf16.mxu0 %v1490
  %1650 = vmatpush1.bf16.msra.mxu0 %v1489
  %1651 = vmatprep.subr.bf16.mxu0 %v1492
  %1652 = vmatpush1.bf16.msra.mxu0 %v1491
  %1653 = vmatprep.subr.bf16.mxu0 %v1494
  %1654 = vmatpush1.bf16.msra.mxu0 %v1493
  %1655 = vmatprep.subr.bf16.mxu0 %v1496
  %1656 = vmatpush1.bf16.msra.mxu0 %v1495
  %1657 = vmatprep.subr.bf16.mxu0 %v1498
  %1658 = vmatpush1.bf16.msra.mxu0 %v1497
  %1659 = vmatprep.subr.bf16.mxu0 %v1500
  %1660 = vmatpush1.bf16.msra.mxu0 %v1499
  %1661 = vmatprep.subr.bf16.mxu0 %v1502
  %1662 = vmatpush1.bf16.msra.mxu0 %v1501
  %1663 = vmatprep.subr.bf16.mxu0 %v1504
  %1664 = vmatpush1.bf16.msra.mxu0 %v1503
  %1665 = vmatprep.subr.bf16.mxu0 %v1506
  %1666 = vmatpush1.bf16.msra.mxu0 %v1505
  %1667 = vmatprep.subr.bf16.mxu0 %v1508
  %1668 = vmatpush1.bf16.msra.mxu0 %v1507
  %1669 = vmatprep.subr.bf16.mxu0 %v1510
  %1670 = vmatpush1.bf16.msra.mxu0 %v1509
  %1671 = vmatprep.subr.bf16.mxu0 %v1512
  %1672 = vmatpush1.bf16.msra.mxu0 %v1511
  %1673 = vmatprep.subr.bf16.mxu0 %v1514
  %1674 = vmatpush1.bf16.msra.mxu0 %v1513
  %1675 = vmatprep.subr.bf16.mxu0 %v1516
  %1676 = vmatpush1.bf16.msra.mxu0 %v1515
  %1677 = vmatprep.subr.bf16.mxu0 %v1518
  %1678 = vmatpush1.bf16.msra.mxu0 %v1517
  %1679 = vmatprep.subr.bf16.mxu0 %v1520
  %1680 = vmatpush1.bf16.msra.mxu0 %v1519
  %1681 = vmatprep.mubr.bf16.mxu0 %v1143
  %1682 = vmatmul.mubr.bf16.gmra.mrb[0].mxu0 %v1127
  %v1683 = vpop.f32.mrb[0].mxu0
  %v1684 = vadd.f32 %v1244, %v1683
  %v1685 = vpop.f32.mrb[0].mxu0
  %v1686 = vadd.f32 %v1248, %v1685
  %v1687 = vpop.f32.mrb[0].mxu0
  %v1688 = vadd.f32 %v1244, %v1687
  %v1689 = vpop.f32.mrb[0].mxu0
  %v1690 = vadd.f32 %v1248, %v1689
  %1691 = vmatprep.mubr.bf16.mxu0 %v1145
  %1692 = vmatmul.mubr.bf16.gmra.mrb[0].mxu0 %v1128
  %v1693 = vpop.f32.mrb[0].mxu0
  %v1694 = vadd.f32 %v1244, %v1693
  %v1695 = vpop.f32.mrb[0].mxu0
  %v1696 = vadd.f32 %v1248, %v1695
  %v1697 = vpop.f32.mrb[0].mxu0
  %v1698 = vadd.f32 %v1244, %v1697
  %v1699 = vpop.f32.mrb[0].mxu0
  %v1700 = vadd.f32 %v1248, %v1699
  %1701 = vmatprep.mubr.bf16.mxu0 %v1147
  %1702 = vmatmul.mubr.bf16.gmra.mrb[0].mxu0 %v1129
  %v1703 = vpop.f32.mrb[0].mxu0
  %v1704 = vadd.f32 %v1244, %v1703
  %v1705 = vpop.f32.mrb[0].mxu0
  %v1706 = vadd.f32 %v1248, %v1705
  %v1707 = vpop.f32.mrb[0].mxu0
  %v1708 = vadd.f32 %v1244, %v1707
  %v1709 = vpop.f32.mrb[0].mxu0
  %v1710 = vadd.f32 %v1248, %v1709
  %1711 = vmatprep.mubr.bf16.mxu0 %v1149
  %1712 = vmatmul.mubr.bf16.gmra.mrb[0].mxu0 %v1130
  %v1713 = vpop.f32.mrb[0].mxu0
  %v1714 = vadd.f32 %v1244, %v1713
  %v1715 = vpop.f32.mrb[0].mxu0
  %v1716 = vadd.f32 %v1248, %v1715
  %v1717 = vpop.f32.mrb[0].mxu0
  %v1718 = vadd.f32 %v1244, %v1717
  %v1719 = vpop.f32.mrb[0].mxu0
  %v1720 = vadd.f32 %v1248, %v1719
  %1721 = vmatprep.mubr.bf16.mxu0 %v1151
  %1722 = vmatmul.mubr.bf16.gmra.mrb[0].mxu0 %v1131
  %v1723 = vpop.f32.mrb[0].mxu0
  %v1724 = vadd.f32 %v1244, %v1723
  %v1725 = vpop.f32.mrb[0].mxu0
  %v1726 = vadd.f32 %v1248, %v1725
  %v1727 = vpop.f32.mrb[0].mxu0
  %v1728 = vadd.f32 %v1244, %v1727
  %v1729 = vpop.f32.mrb[0].mxu0
  %v1730 = vadd.f32 %v1248, %v1729
  %1731 = vdwg.mxu0
  %1732 = vmatprep.subr.bf16.mxu0 %v1522
  %1733 = vmatpush1.bf16.msra.mxu0 %v1521
  %1734 = vmatprep.subr.bf16.mxu0 %v1524
  %1735 = vmatpush1.bf16.msra.mxu0 %v1523
  %1736 = vmatprep.subr.bf16.mxu0 %v1526
  %1737 = vmatpush1.bf16.msra.mxu0 %v1525
  %1738 = vmatprep.subr.bf16.mxu0 %v1528
  %1739 = vmatpush1.bf16.msra.mxu0 %v1527
  %1740 = vmatprep.subr.bf16.mxu0 %v1530
  %1741 = vmatpush1.bf16.msra.mxu0 %v1529
  %1742 = vmatprep.subr.bf16.mxu0 %v1532
  %1743 = vmatpush1.bf16.msra.mxu0 %v1531
  %1744 = vmatprep.subr.bf16.mxu0 %v1534
  %1745 = vmatpush1.bf16.msra.mxu0 %v1533
  %1746 = vmatprep.subr.bf16.mxu0 %v1536
  %1747 = vmatpush1.bf16.msra.mxu0 %v1535
  %1748 = vmatprep.subr.bf16.mxu0 %v1538
  %1749 = vmatpush1.bf16.msra.mxu0 %v1537
  %1750 = vmatprep.subr.bf16.mxu0 %v1540
  %1751 = vmatpush1.bf16.msra.mxu0 %v1539
  %1752 = vmatprep.subr.bf16.mxu0 %v1542
  %1753 = vmatpush1.bf16.msra.mxu0 %v1541
  %1754 = vmatprep.subr.bf16.mxu0 %v1544
  %1755 = vmatpush1.bf16.msra.mxu0 %v1543
  %1756 = vmatprep.subr.bf16.mxu0 %v1546
  %1757 = vmatpush1.bf16.msra.mxu0 %v1545
  %1758 = vmatprep.subr.bf16.mxu0 %v1548
  %1759 = vmatpush1.bf16.msra.mxu0 %v1547
  %1760 = vmatprep.subr.bf16.mxu0 %v1550
  %1761 = vmatpush1.bf16.msra.mxu0 %v1549
  %1762 = vmatprep.subr.bf16.mxu0 %v1552
  %1763 = vmatpush1.bf16.msra.mxu0 %v1551
  %1764 = vmatprep.mubr.bf16.mxu0 %v1145
  %1765 = vmatmul.mubr.bf16.gmra.mrb[0].mxu0 %v1128
  %v1766 = vpop.f32.mrb[0].mxu0
  %v1767 = vadd.f32 %v1684, %v1766
  %v1768 = vpop.f32.mrb[0].mxu0
  %v1769 = vadd.f32 %v1686, %v1768
  %v1770 = vpop.f32.mrb[0].mxu0
  %v1771 = vadd.f32 %v1688, %v1770
  %v1772 = vpop.f32.mrb[0].mxu0
  %v1773 = vadd.f32 %v1690, %v1772
  %1774 = vmatprep.mubr.bf16.mxu0 %v1147
  %1775 = vmatmul.mubr.bf16.gmra.mrb[0].mxu0 %v1129
  %v1776 = vpop.f32.mrb[0].mxu0
  %v1777 = vadd.f32 %v1694, %v1776
  %v1778 = vpop.f32.mrb[0].mxu0
  %v1779 = vadd.f32 %v1696, %v1778
  %v1780 = vpop.f32.mrb[0].mxu0
  %v1781 = vadd.f32 %v1698, %v1780
  %v1782 = vpop.f32.mrb[0].mxu0
  %v1783 = vadd.f32 %v1700, %v1782
  %1784 = vmatprep.mubr.bf16.mxu0 %v1149
  %1785 = vmatmul.mubr.bf16.gmra.mrb[0].mxu0 %v1130
  %v1786 = vpop.f32.mrb[0].mxu0
  %v1787 = vadd.f32 %v1704, %v1786
  %v1788 = vpop.f32.mrb[0].mxu0
  %v1789 = vadd.f32 %v1706, %v1788
  %v1790 = vpop.f32.mrb[0].mxu0
  %v1791 = vadd.f32 %v1708, %v1790
  %v1792 = vpop.f32.mrb[0].mxu0
  %v1793 = vadd.f32 %v1710, %v1792
  %1794 = vmatprep.mubr.bf16.mxu0 %v1151
  %1795 = vmatmul.mubr.bf16.gmra.mrb[0].mxu0 %v1131
  %v1796 = vpop.f32.mrb[0].mxu0
  %v1797 = vadd.f32 %v1714, %v1796
  %v1798 = vpop.f32.mrb[0].mxu0
  %v1799 = vadd.f32 %v1716, %v1798
  %v1800 = vpop.f32.mrb[0].mxu0
  %v1801 = vadd.f32 %v1718, %v1800
  %v1802 = vpop.f32.mrb[0].mxu0
  %v1803 = vadd.f32 %v1720, %v1802
  %1804 = vmatprep.mubr.bf16.mxu0 %v1159
  %1805 = vmatmul.mubr.bf16.gmra.mrb[0].mxu0 %v1132
  %v1806 = vpop.f32.mrb[0].mxu0
  %v1807 = vadd.f32 %v1724, %v1806
  %v1808 = vpop.f32.mrb[0].mxu0
  %v1809 = vadd.f32 %v1726, %v1808
  %v1810 = vpop.f32.mrb[0].mxu0
  %v1811 = vadd.f32 %v1728, %v1810
  %v1812 = vpop.f32.mrb[0].mxu0
  %v1813 = vadd.f32 %v1730, %v1812
  %1814 = vdwg.mxu0
  %1815 = vmatprep.subr.bf16.mxu0 %v1554
  %1816 = vmatpush1.bf16.msra.mxu0 %v1553
  %1817 = vmatprep.subr.bf16.mxu0 %v1556
  %1818 = vmatpush1.bf16.msra.mxu0 %v1555
  %1819 = vmatprep.subr.bf16.mxu0 %v1558
  %1820 = vmatpush1.bf16.msra.mxu0 %v1557
  %1821 = vmatprep.subr.bf16.mxu0 %v1560
  %1822 = vmatpush1.bf16.msra.mxu0 %v1559
  %1823 = vmatprep.subr.bf16.mxu0 %v1562
  %1824 = vmatpush1.bf16.msra.mxu0 %v1561
  %1825 = vmatprep.subr.bf16.mxu0 %v1564
  %1826 = vmatpush1.bf16.msra.mxu0 %v1563
  %1827 = vmatprep.subr.bf16.mxu0 %v1566
  %1828 = vmatpush1.bf16.msra.mxu0 %v1565
  %1829 = vmatprep.subr.bf16.mxu0 %v1568
  %1830 = vmatpush1.bf16.msra.mxu0 %v1567
  %1831 = vmatprep.subr.bf16.mxu0 0
  %1832 = vmatpush1.bf16.msra.mxu0 0
  %1833 = vmatprep.subr.bf16.mxu0 0
  %1834 = vmatpush1.bf16.msra.mxu0 0
  %1835 = vmatprep.subr.bf16.mxu0 0
  %1836 = vmatpush1.bf16.msra.mxu0 0
  %1837 = vmatprep.subr.bf16.mxu0 0
  %1838 = vmatpush1.bf16.msra.mxu0 0
  %1839 = vmatprep.subr.bf16.mxu0 0
  %1840 = vmatpush1.bf16.msra.mxu0 0
  %1841 = vmatprep.subr.bf16.mxu0 0
  %1842 = vmatpush1.bf16.msra.mxu0 0
  %1843 = vmatprep.subr.bf16.mxu0 0
  %1844 = vmatpush1.bf16.msra.mxu0 0
  %1845 = vmatprep.subr.bf16.mxu0 0
  %1846 = vmatpush1.bf16.msra.mxu0 0
  %1847 = vmatprep.mubr.bf16.mxu0 0
  %1848 = vmatmul.mubr.bf16.gmra.mrb[0].mxu0 %v1129
  %v1849 = vpop.f32.mrb[0].mxu0
  %v1850 = vadd.f32 %v1767, %v1849
  %v1851 = vpop.f32.mrb[0].mxu0
  %v1852 = vadd.f32 %v1769, %v1851
  %v1853 = vpop.f32.mrb[0].mxu0
  %v1854 = vadd.f32 %v1771, %v1853
  %v1855 = vpop.f32.mrb[0].mxu0
  %v1856 = vadd.f32 %v1773, %v1855
  %1857 = vmatprep.mubr.bf16.mxu0 0
  %1858 = vmatmul.mubr.bf16.gmra.mrb[0].mxu0 %v1130
  %v1859 = vpop.f32.mrb[0].mxu0
  %v1860 = vadd.f32 %v1777, %v1859
  %v1861 = vpop.f32.mrb[0].mxu0
  %v1862 = vadd.f32 %v1779, %v1861
  %v1863 = vpop.f32.mrb[0].mxu0
  %v1864 = vadd.f32 %v1781, %v1863
  %v1865 = vpop.f32.mrb[0].mxu0
  %v1866 = vadd.f32 %v1783, %v1865
  %1867 = vmatprep.mubr.bf16.mxu0 0
  %1868 = vmatmul.mubr.bf16.gmra.mrb[0].mxu0 %v1131
  %v1869 = vpop.f32.mrb[0].mxu0
  %v1870 = vadd.f32 %v1787, %v1869
  %v1871 = vpop.f32.mrb[0].mxu0
  %v1872 = vadd.f32 %v1789, %v1871
  %v1873 = vpop.f32.mrb[0].mxu0
  %v1874 = vadd.f32 %v1791, %v1873
  %v1875 = vpop.f32.mrb[0].mxu0
  %v1876 = vadd.f32 %v1793, %v1875
  %1877 = vmatprep.mubr.bf16.mxu0 0
  %1878 = vmatmul.mubr.bf16.gmra.mrb[0].mxu0 %v1132
  %v1879 = vpop.f32.mrb[0].mxu0
  %v1880 = vadd.f32 %v1797, %v1879
  %v1881 = vpop.f32.mrb[0].mxu0
  %v1882 = vadd.f32 %v1799, %v1881
  %v1883 = vpop.f32.mrb[0].mxu0
  %v1884 = vadd.f32 %v1801, %v1883
  %v1885 = vpop.f32.mrb[0].mxu0
  %v1886 = vadd.f32 %v1803, %v1885
  %1887 = vmatprep.mubr.bf16.mxu0 0
  %1888 = vmatmul.mubr.bf16.gmra.mrb[0].mxu0 %v1133
  %v1889 = vpop.f32.mrb[0].mxu0
  %v1890 = vadd.f32 %v1807, %v1889
  %v1891 = vpop.f32.mrb[0].mxu0
  %v1892 = vadd.f32 %v1809, %v1891
  %v1893 = vpop.f32.mrb[0].mxu0
  %v1894 = vadd.f32 %v1811, %v1893
  %v1895 = vpop.f32.mrb[0].mxu0
  %v1896 = vadd.f32 %v1813, %v1895
  %1897 = vdwg.mxu0
  %v1898 = vpack.c.bf16 %v1854, %v1850
  %v1899 = vpack.c.bf16 %v1856, %v1852
  %v1900 = vpack.c.bf16 %v1864, %v1860
  %v1901 = vpack.c.bf16 %v1866, %v1862
  %v1902 = vpack.c.bf16 %v1874, %v1870
  %v1903 = vpack.c.bf16 %v1876, %v1872
  %v1904 = vpack.c.bf16 %v1884, %v1880
  %v1905 = vpack.c.bf16 %v1886, %v1882
  %v1906 = vpack.c.bf16 %v1894, %v1890
  %v1907 = vpack.c.bf16 %v1896, %v1892
  %v1908 = vld [vmem:[%s1 + $0x3c8] sm:$0xf]
  %v1909 = vld [vmem:[%s1 + $0x3d0] sm:$0xf]
  %v1910 = vld [vmem:[%s1 + $0x3d8] sm:$0xf]
  %v1911 = vld [vmem:[%s1 + $0x3e0] sm:$0xf]
  %v1912 = vld [vmem:[%s1 + $0x3e8] sm:$0xf]
  %v1913 = vld [vmem:[%s1 + $0x3f0] sm:$0xf]
  %v1914 = vld [vmem:[%s1 + $0x3f8] sm:$0xf]
  %v1915 = vld [vmem:[%s1 + $0x400] sm:$0xf]
  %v1916 = vld [vmem:[%s1 + $0x408] sm:$0xf]
  %v1917 = vld [vmem:[%s1 + $0x410] sm:$0xf]
  %v1918 = vld [vmem:[%s1 + $0x418] sm:$0xf]
  %v1919 = vld [vmem:[%s1 + $0x420] sm:$0xf]
  %v1920 = vld [vmem:[%s1 + $0x428] sm:$0xf]
  %v1921 = vld [vmem:[%s1 + $0x430] sm:$0xf]
  %v1922 = vld [vmem:[%s1 + $0x438] sm:$0xf]
  %v1923 = vld [vmem:[%s1 + $0x440] sm:$0xf]
  %v1924 = vld [vmem:[%s1 + $0x448] sm:$0xf]
  %v1925 = vld [vmem:[%s1 + $0x450] sm:$0xf]
  %v1926 = vld [vmem:[%s1 + $0x458] sm:$0xf]
  %v1927 = vld [vmem:[%s1 + $0x460] sm:$0xf]
  %v1948 = vunpack.c.l.b16 %v1908
  %v1949 = vunpack.c.l.b16 %v1909
  %v1950 = vunpack.c.l.b16 %v1910
  %v1951 = vunpack.c.l.b16 %v1911
  %v1952 = vunpack.c.l.b16 %v1912
  %v1953 = vunpack.c.l.b16 %v1913
  %v1954 = vunpack.c.l.b16 %v1914
  %v1955 = vunpack.c.l.b16 %v1915
  %v1956 = vunpack.c.l.b16 %v1916
  %v1957 = vunpack.c.l.b16 %v1917
  %v1958 = vunpack.c.l.b16 %v1918
  %v1959 = vunpack.c.l.b16 %v1919
  %v1960 = vunpack.c.l.b16 %v1920
  %v1961 = vunpack.c.l.b16 %v1921
  %v1962 = vunpack.c.l.b16 %v1922
  %v1963 = vunpack.c.l.b16 %v1923
  %v1964 = vunpack.c.l.b16 %v1924
  %v1965 = vunpack.c.l.b16 %v1925
  %v1966 = vunpack.c.l.b16 %v1926
  %v1967 = vunpack.c.l.b16 %v1927
  %v1968 = vpack.c.b16 %v1949, %v1948
  %v1969 = vpack.c.b16 %v1951, %v1950
  %v1970 = vpack.c.b16 %v1953, %v1952
  %v1971 = vpack.c.b16 %v1955, %v1954
  %v1972 = vpack.c.b16 %v1957, %v1956
  %v1973 = vpack.c.b16 %v1959, %v1958
  %v1974 = vpack.c.b16 %v1961, %v1960
  %v1975 = vpack.c.b16 %v1963, %v1962
  %v1976 = vpack.c.b16 %v1965, %v1964
  %v1977 = vpack.c.b16 %v1967, %v1966
  %v1989 = vsel %vm299, %v1899, 0
  %v1992 = vsel %vm299, %v1901, 0
  %v1995 = vsel %vm299, %v1903, 0
  %v1998 = vsel %vm299, %v1905, 0
  %v2001 = vsel %vm299, %v1907, 0
  %2003 = vmatprep.subr.bf16.mxu0 0
  %2004 = vmatpush1.bf16.msra.mxu0 %v1968
  %2005 = vmatprep.subr.bf16.mxu0 0
  %2006 = vmatpush1.bf16.msra.mxu0 %v1969
  %2007 = vmatprep.subr.bf16.mxu0 0
  %2008 = vmatpush1.bf16.msra.mxu0 %v1970
  %2009 = vmatprep.subr.bf16.mxu0 0
  %2010 = vmatpush1.bf16.msra.mxu0 %v1971
  %2011 = vmatprep.subr.bf16.mxu0 0
  %2012 = vmatpush1.bf16.msra.mxu0 %v1972
  %2013 = vmatprep.subr.bf16.mxu0 0
  %2014 = vmatpush1.bf16.msra.mxu0 %v1973
  %2015 = vmatprep.subr.bf16.mxu0 0
  %2016 = vmatpush1.bf16.msra.mxu0 %v1974
  %2017 = vmatprep.subr.bf16.mxu0 0
  %2018 = vmatpush1.bf16.msra.mxu0 %v1975
  %2019 = vmatprep.subr.bf16.mxu0 0
  %2020 = vmatpush1.bf16.msra.mxu0 %v1976
  %2021 = vmatprep.subr.bf16.mxu0 0
  %2022 = vmatpush1.bf16.msra.mxu0 %v1977
  %2023 = vmatprep.subr.bf16.mxu0 0
  %2024 = vmatpush1.bf16.msra.mxu0 0
  %2025 = vmatprep.subr.bf16.mxu0 0
  %2026 = vmatpush1.bf16.msra.mxu0 0
  %2027 = vmatprep.subr.bf16.mxu0 0
  %2028 = vmatpush1.bf16.msra.mxu0 0
  %2029 = vmatprep.subr.bf16.mxu0 0
  %2030 = vmatpush1.bf16.msra.mxu0 0
  %2031 = vmatprep.subr.bf16.mxu0 0
  %2032 = vmatpush1.bf16.msra.mxu0 0
  %2033 = vmatprep.subr.bf16.mxu0 0
  %2034 = vmatpush1.bf16.msra.mxu0 0
  %2035 = vmatprep.mubr.bf16.mxu0 %v1989
  %2036 = vmatmul.mubr.bf16.gmra.mrb[0].mxu0 %v1898
  %v2037 = vpop.f32.mrb[0].mxu0
  %v2038 = vadd.f32 0.0, %v2037
  %v2039 = vpop.f32.mrb[0].mxu0
  %v2040 = vpop.f32.mrb[0].mxu0
  %v2041 = vadd.f32 0.0, %v2040
  %v2042 = vpop.f32.mrb[0].mxu0
  %2043 = vmatprep.mubr.bf16.mxu0 %v1992
  %2044 = vmatmul.mubr.bf16.gmra.mrb[0].mxu0 %v1900
  %v2045 = vpop.f32.mrb[0].mxu0
  %v2046 = vadd.f32 0.0, %v2045
  %v2047 = vpop.f32.mrb[0].mxu0
  %v2048 = vpop.f32.mrb[0].mxu0
  %v2049 = vadd.f32 0.0, %v2048
  %v2050 = vpop.f32.mrb[0].mxu0
  %2051 = vmatprep.mubr.bf16.mxu0 %v1995
  %2052 = vmatmul.mubr.bf16.gmra.mrb[0].mxu0 %v1902
  %v2053 = vpop.f32.mrb[0].mxu0
  %v2054 = vadd.f32 0.0, %v2053
  %v2055 = vpop.f32.mrb[0].mxu0
  %v2056 = vpop.f32.mrb[0].mxu0
  %v2057 = vadd.f32 0.0, %v2056
  %v2058 = vpop.f32.mrb[0].mxu0
  %2059 = vmatprep.mubr.bf16.mxu0 %v1998
  %2060 = vmatmul.mubr.bf16.gmra.mrb[0].mxu0 %v1904
  %v2061 = vpop.f32.mrb[0].mxu0
  %v2062 = vadd.f32 0.0, %v2061
  %v2063 = vpop.f32.mrb[0].mxu0
  %v2064 = vpop.f32.mrb[0].mxu0
  %v2065 = vadd.f32 0.0, %v2064
  %v2066 = vpop.f32.mrb[0].mxu0
  %2067 = vmatprep.mubr.bf16.mxu0 %v2001
  %2068 = vmatmul.mubr.bf16.gmra.mrb[0].mxu0 %v1906
  %v2069 = vpop.f32.mrb[0].mxu0
  %v2070 = vadd.f32 0.0, %v2069
  %v2071 = vpop.f32.mrb[0].mxu0
  %v2072 = vpop.f32.mrb[0].mxu0
  %v2073 = vadd.f32 0.0, %v2072
  %v2074 = vpop.f32.mrb[0].mxu0
  %2075 = vdwg.mxu0
  %v2076 = vadd.f32 %v2038, %v2041
  %v2077 = vmul.f32 %v2076, 0.5
  %v2078 = vadd.f32 %v2046, %v2049
  %v2079 = vmul.f32 %v2078, 0.5
  %v2080 = vadd.f32 %v2054, %v2057
  %v2081 = vmul.f32 %v2080, 0.5
  %v2082 = vadd.f32 %v2062, %v2065
  %v2083 = vmul.f32 %v2082, 0.5
  %v2084 = vadd.f32 %v2070, %v2073
  %v2085 = vmul.f32 %v2084, 0.5
  %v2086 = vpack.c.bf16 %v2077, %v2077
  %v2087 = vpack.c.bf16 %v2079, %v2079
  %v2088 = vpack.c.bf16 %v2081, %v2081
  %v2089 = vpack.c.bf16 %v2083, %v2083
  %v2090 = vpack.c.bf16 %v2085, %v2085
  %v2091 = vld [vmem:[%s1 + $0x468] sm:$0xf]
  %v2092 = vld [vmem:[%s1 + $0x470] sm:$0xf]
  %v2093 = vld [vmem:[%s1 + $0x478] sm:$0xf]
  %v2094 = vld [vmem:[%s1 + $0x480] sm:$0xf]
  %v2095 = vld [vmem:[%s1 + $0x488] sm:$0xf]
  %v2096 = vld [vmem:[%s1 + $0x490] sm:$0xf]
  %v2097 = vld [vmem:[%s1 + $0x498] sm:$0xf]
  %v2098 = vld [vmem:[%s1 + $0x4a0] sm:$0xf]
  %v2099 = vld [vmem:[%s1 + $0x4a8] sm:$0xf]
  %v2100 = vld [vmem:[%s1 + $0x4b0] sm:$0xf]
  %v2101 = vld [vmem:[%s1 + $0x4b8] sm:$0xf]
  %v2102 = vld [vmem:[%s1 + $0x4c0] sm:$0xf]
  %v2103 = vld [vmem:[%s1 + $0x4c8] sm:$0xf]
  %v2104 = vld [vmem:[%s1 + $0x4d0] sm:$0xf]
  %v2105 = vld [vmem:[%s1 + $0x4d8] sm:$0xf]
  %v2106 = vld [vmem:[%s1 + $0x4e0] sm:$0xf]
  %v2107 = vld [vmem:[%s1 + $0x4e8] sm:$0xf]
  %v2108 = vld [vmem:[%s1 + $0x4f0] sm:$0xf]
  %v2109 = vld [vmem:[%s1 + $0x4f8] sm:$0xf]
  %v2110 = vld [vmem:[%s1 + $0x500] sm:$0xf]
  %v2111 = vld [vmem:[%s1 + $0x508] sm:$0xf]
  %v2112 = vld [vmem:[%s1 + $0x510] sm:$0xf]
  %v2113 = vld [vmem:[%s1 + $0x518] sm:$0xf]
  %v2114 = vld [vmem:[%s1 + $0x520] sm:$0xf]
  %v2115 = vld [vmem:[%s1 + $0x528] sm:$0xf]
  %v2116 = vld [vmem:[%s1 + $0x530] sm:$0xf]
  %v2117 = vld [vmem:[%s1 + $0x538] sm:$0xf]
  %v2118 = vld [vmem:[%s1 + $0x540] sm:$0xf]
  %v2119 = vld [vmem:[%s1 + $0x548] sm:$0xf]
  %v2120 = vld [vmem:[%s1 + $0x550] sm:$0xf]
  %v2121 = vld [vmem:[%s1 + $0x558] sm:$0xf]
  %v2122 = vld [vmem:[%s1 + $0x560] sm:$0xf]
  %v2123 = vld [vmem:[%s1 + $0x568] sm:$0xf]
  %v2124 = vld [vmem:[%s1 + $0x570] sm:$0xf]
  %v2125 = vld [vmem:[%s1 + $0x578] sm:$0xf]
  %v2126 = vld [vmem:[%s1 + $0x580] sm:$0xf]
  %v2127 = vld [vmem:[%s1 + $0x588] sm:$0xf]
  %v2128 = vld [vmem:[%s1 + $0x590] sm:$0xf]
  %v2129 = vld [vmem:[%s1 + $0x598] sm:$0xf]
  %v2130 = vld [vmem:[%s1 + $0x5a0] sm:$0xf]
  %v2131 = vld [vmem:[%s1 + $0x5a8] sm:$0xf]
  %v2132 = vld [vmem:[%s1 + $0x5b0] sm:$0xf]
  %v2133 = vld [vmem:[%s1 + $0x5b8] sm:$0xf]
  %v2134 = vld [vmem:[%s1 + $0x5c0] sm:$0xf]
  %v2135 = vld [vmem:[%s1 + $0x5c8] sm:$0xf]
  %v2136 = vld [vmem:[%s1 + $0x5d0] sm:$0xf]
  %v2137 = vld [vmem:[%s1 + $0x5d8] sm:$0xf]
  %v2138 = vld [vmem:[%s1 + $0x5e0] sm:$0xf]
  %v2139 = vld [vmem:[%s1 + $0x5e8] sm:$0xf]
  %v2140 = vld [vmem:[%s1 + $0x5f0] sm:$0xf]
  %v2141 = vld [vmem:[%s1 + $0x5f8] sm:$0xf]
  %v2142 = vld [vmem:[%s1 + $0x600] sm:$0xf]
  %v2143 = vld [vmem:[%s1 + $0x608] sm:$0xf]
  %v2144 = vld [vmem:[%s1 + $0x610] sm:$0xf]
  %v2145 = vld [vmem:[%s1 + $0x618] sm:$0xf]
  %v2146 = vld [vmem:[%s1 + $0x620] sm:$0xf]
  %v2147 = vld [vmem:[%s1 + $0x628] sm:$0xf]
  %v2148 = vld [vmem:[%s1 + $0x630] sm:$0xf]
  %v2149 = vld [vmem:[%s1 + $0x638] sm:$0xf]
  %v2150 = vld [vmem:[%s1 + $0x640] sm:$0xf]
  %v2151 = vld [vmem:[%s1 + $0x648] sm:$0xf]
  %v2152 = vld [vmem:[%s1 + $0x650] sm:$0xf]
  %v2153 = vld [vmem:[%s1 + $0x658] sm:$0xf]
  %v2154 = vld [vmem:[%s1 + $0x660] sm:$0xf]
  %v2155 = vld [vmem:[%s1 + $0x668] sm:$0xf]
  %v2156 = vld [vmem:[%s1 + $0x670] sm:$0xf]
  %v2157 = vld [vmem:[%s1 + $0x678] sm:$0xf]
  %v2158 = vld [vmem:[%s1 + $0x680] sm:$0xf]
  %v2159 = vld [vmem:[%s1 + $0x688] sm:$0xf]
  %v2160 = vld [vmem:[%s1 + $0x690] sm:$0xf]
  %v2161 = vld [vmem:[%s1 + $0x698] sm:$0xf]
  %v2162 = vld [vmem:[%s1 + $0x6a0] sm:$0xf]
  %v2163 = vld [vmem:[%s1 + $0x6a8] sm:$0xf]
  %v2164 = vld [vmem:[%s1 + $0x6b0] sm:$0xf]
  %v2165 = vld [vmem:[%s1 + $0x6b8] sm:$0xf]
  %v2166 = vld [vmem:[%s1 + $0x6c0] sm:$0xf]
  %v2167 = vld [vmem:[%s1 + $0x6c8] sm:$0xf]
  %v2168 = vld [vmem:[%s1 + $0x6d0] sm:$0xf]
  %v2169 = vld [vmem:[%s1 + $0x6d8] sm:$0xf]
  %v2170 = vld [vmem:[%s1 + $0x6e0] sm:$0xf]
  %v2171 = vlaneseq
  %v2172 = vshrl.u32 %v2171, 7
  %v2173 = vsub.s32 2, %v2172
  %v2174 = vrot.slane %v15, %v2173
  %v2255 = vunpack.c.l.b16 %v2091
  %v2256 = vunpack.c.l.b16 %v2092
  %v2257 = vunpack.c.l.b16 %v2093
  %v2258 = vunpack.c.l.b16 %v2094
  %v2259 = vunpack.c.l.b16 %v2095
  %v2260 = vunpack.c.l.b16 %v2096
  %v2261 = vunpack.c.l.b16 %v2097
  %v2262 = vunpack.c.l.b16 %v2098
  %v2263 = vunpack.c.l.b16 %v2099
  %v2264 = vunpack.c.l.b16 %v2100
  %v2265 = vunpack.c.l.b16 %v2101
  %v2266 = vunpack.c.l.b16 %v2102
  %v2267 = vunpack.c.l.b16 %v2103
  %v2268 = vunpack.c.l.b16 %v2104
  %v2269 = vunpack.c.l.b16 %v2105
  %v2270 = vunpack.c.l.b16 %v2106
  %v2271 = vunpack.c.l.b16 %v2107
  %v2272 = vunpack.c.l.b16 %v2108
  %v2273 = vunpack.c.l.b16 %v2109
  %v2274 = vunpack.c.l.b16 %v2110
  %v2275 = vunpack.c.l.b16 %v2111
  %v2276 = vunpack.c.l.b16 %v2112
  %v2277 = vunpack.c.l.b16 %v2113
  %v2278 = vunpack.c.l.b16 %v2114
  %v2279 = vunpack.c.l.b16 %v2115
  %v2280 = vunpack.c.l.b16 %v2116
  %v2281 = vunpack.c.l.b16 %v2117
  %v2282 = vunpack.c.l.b16 %v2118
  %v2283 = vunpack.c.l.b16 %v2119
  %v2284 = vunpack.c.l.b16 %v2120
  %v2285 = vunpack.c.l.b16 %v2121
  %v2286 = vunpack.c.l.b16 %v2122
  %v2287 = vunpack.c.l.b16 %v2123
  %v2288 = vunpack.c.l.b16 %v2124
  %v2289 = vunpack.c.l.b16 %v2125
  %v2290 = vunpack.c.l.b16 %v2126
  %v2291 = vunpack.c.l.b16 %v2127
  %v2292 = vunpack.c.l.b16 %v2128
  %v2293 = vunpack.c.l.b16 %v2129
  %v2294 = vunpack.c.l.b16 %v2130
  %v2295 = vunpack.c.l.b16 %v2131
  %v2296 = vunpack.c.l.b16 %v2132
  %v2297 = vunpack.c.l.b16 %v2133
  %v2298 = vunpack.c.l.b16 %v2134
  %v2299 = vunpack.c.l.b16 %v2135
  %v2300 = vunpack.c.l.b16 %v2136
  %v2301 = vunpack.c.l.b16 %v2137
  %v2302 = vunpack.c.l.b16 %v2138
  %v2303 = vunpack.c.l.b16 %v2139
  %v2304 = vunpack.c.l.b16 %v2140
  %v2305 = vunpack.c.l.b16 %v2141
  %v2306 = vunpack.c.l.b16 %v2142
  %v2307 = vunpack.c.l.b16 %v2143
  %v2308 = vunpack.c.l.b16 %v2144
  %v2309 = vunpack.c.l.b16 %v2145
  %v2310 = vunpack.c.l.b16 %v2146
  %v2311 = vunpack.c.l.b16 %v2147
  %v2312 = vunpack.c.l.b16 %v2148
  %v2313 = vunpack.c.l.b16 %v2149
  %v2314 = vunpack.c.l.b16 %v2150
  %v2315 = vunpack.c.l.b16 %v2151
  %v2316 = vunpack.c.l.b16 %v2152
  %v2317 = vunpack.c.l.b16 %v2153
  %v2318 = vunpack.c.l.b16 %v2154
  %v2319 = vunpack.c.l.b16 %v2155
  %v2320 = vunpack.c.l.b16 %v2156
  %v2321 = vunpack.c.l.b16 %v2157
  %v2322 = vunpack.c.l.b16 %v2158
  %v2323 = vunpack.c.l.b16 %v2159
  %v2324 = vunpack.c.l.b16 %v2160
  %v2325 = vunpack.c.l.b16 %v2161
  %v2326 = vunpack.c.l.b16 %v2162
  %v2327 = vunpack.c.l.b16 %v2163
  %v2328 = vunpack.c.l.b16 %v2164
  %v2329 = vunpack.c.l.b16 %v2165
  %v2330 = vunpack.c.l.b16 %v2166
  %v2331 = vunpack.c.l.b16 %v2167
  %v2332 = vunpack.c.l.b16 %v2168
  %v2333 = vunpack.c.l.b16 %v2169
  %v2334 = vunpack.c.l.b16 %v2170
  %v2335 = vpack.c.b16 %v2256, %v2255
  %v2336 = vpack.c.b16 %v2258, %v2257
  %v2337 = vpack.c.b16 %v2260, %v2259
  %v2338 = vpack.c.b16 %v2262, %v2261
  %v2339 = vpack.c.b16 %v2264, %v2263
  %v2340 = vpack.c.b16 %v2266, %v2265
  %v2341 = vpack.c.b16 %v2268, %v2267
  %v2342 = vpack.c.b16 %v2270, %v2269
  %v2343 = vpack.c.b16 %v2272, %v2271
  %v2344 = vpack.c.b16 %v2274, %v2273
  %v2345 = vpack.c.b16 %v2276, %v2275
  %v2346 = vpack.c.b16 %v2278, %v2277
  %v2347 = vpack.c.b16 %v2280, %v2279
  %v2348 = vpack.c.b16 %v2282, %v2281
  %v2349 = vpack.c.b16 %v2284, %v2283
  %v2350 = vpack.c.b16 %v2286, %v2285
  %v2351 = vpack.c.b16 %v2288, %v2287
  %v2352 = vpack.c.b16 %v2290, %v2289
  %v2353 = vpack.c.b16 %v2292, %v2291
  %v2354 = vpack.c.b16 %v2294, %v2293
  %v2355 = vpack.c.b16 %v2296, %v2295
  %v2356 = vpack.c.b16 %v2298, %v2297
  %v2357 = vpack.c.b16 %v2300, %v2299
  %v2358 = vpack.c.b16 %v2302, %v2301
  %v2359 = vpack.c.b16 %v2304, %v2303
  %v2360 = vpack.c.b16 %v2306, %v2305
  %v2361 = vpack.c.b16 %v2308, %v2307
  %v2362 = vpack.c.b16 %v2310, %v2309
  %v2363 = vpack.c.b16 %v2312, %v2311
  %v2364 = vpack.c.b16 %v2314, %v2313
  %v2365 = vpack.c.b16 %v2316, %v2315
  %v2366 = vpack.c.b16 %v2318, %v2317
  %v2367 = vpack.c.b16 %v2320, %v2319
  %v2368 = vpack.c.b16 %v2322, %v2321
  %v2369 = vpack.c.b16 %v2324, %v2323
  %v2370 = vpack.c.b16 %v2326, %v2325
  %v2371 = vpack.c.b16 %v2328, %v2327
  %v2372 = vpack.c.b16 %v2330, %v2329
  %v2373 = vpack.c.b16 %v2332, %v2331
  %v2374 = vpack.c.b16 %v2334, %v2333
  %2415 = vmatprep.subr.bf16.mxu0 0
  %2416 = vmatpush1.bf16.msra.mxu0 %v2335
  %2417 = vmatprep.subr.bf16.mxu0 0
  %2418 = vmatpush1.bf16.msra.mxu0 %v2336
  %2419 = vmatprep.subr.bf16.mxu0 0
  %2420 = vmatpush1.bf16.msra.mxu0 %v2337
  %2421 = vmatprep.subr.bf16.mxu0 0
  %2422 = vmatpush1.bf16.msra.mxu0 %v2338
  %2423 = vmatprep.subr.bf16.mxu0 0
  %2424 = vmatpush1.bf16.msra.mxu0 %v2339
  %2425 = vmatprep.subr.bf16.mxu0 0
  %2426 = vmatpush1.bf16.msra.mxu0 %v2340
  %2427 = vmatprep.subr.bf16.mxu0 0
  %2428 = vmatpush1.bf16.msra.mxu0 %v2341
  %2429 = vmatprep.subr.bf16.mxu0 0
  %2430 = vmatpush1.bf16.msra.mxu0 %v2342
  %2431 = vmatprep.subr.bf16.mxu0 0
  %2432 = vmatpush1.bf16.msra.mxu0 %v2343
  %2433 = vmatprep.subr.bf16.mxu0 0
  %2434 = vmatpush1.bf16.msra.mxu0 %v2344
  %2435 = vmatprep.subr.bf16.mxu0 0
  %2436 = vmatpush1.bf16.msra.mxu0 %v2345
  %2437 = vmatprep.subr.bf16.mxu0 0
  %2438 = vmatpush1.bf16.msra.mxu0 %v2346
  %2439 = vmatprep.subr.bf16.mxu0 0
  %2440 = vmatpush1.bf16.msra.mxu0 %v2347
  %2441 = vmatprep.subr.bf16.mxu0 0
  %2442 = vmatpush1.bf16.msra.mxu0 %v2348
  %2443 = vmatprep.subr.bf16.mxu0 0
  %2444 = vmatpush1.bf16.msra.mxu0 %v2349
  %2445 = vmatprep.subr.bf16.mxu0 0
  %2446 = vmatpush1.bf16.msra.mxu0 %v2350
  %2447 = vmatprep.mubr.bf16.mxu0 %v2087
  %2448 = vmatmul.mubr.bf16.gmra.mrb[0].mxu0 %v2086
  %v2449 = vpop.f32.mrb[0].mxu0
  %v2450 = vadd.f32 %v2174, %v2449
  %v2451 = vpop.f32.mrb[0].mxu0
  %v2452 = vpop.f32.mrb[0].mxu0
  %v2453 = vpop.f32.mrb[0].mxu0
  %2454 = vdwg.mxu0
  %2455 = vmatprep.subr.bf16.mxu0 0
  %2456 = vmatpush1.bf16.msra.mxu0 %v2351
  %2457 = vmatprep.subr.bf16.mxu0 0
  %2458 = vmatpush1.bf16.msra.mxu0 %v2352
  %2459 = vmatprep.subr.bf16.mxu0 0
  %2460 = vmatpush1.bf16.msra.mxu0 %v2353
  %2461 = vmatprep.subr.bf16.mxu0 0
  %2462 = vmatpush1.bf16.msra.mxu0 %v2354
  %2463 = vmatprep.subr.bf16.mxu0 0
  %2464 = vmatpush1.bf16.msra.mxu0 %v2355
  %2465 = vmatprep.subr.bf16.mxu0 0
  %2466 = vmatpush1.bf16.msra.mxu0 %v2356
  %2467 = vmatprep.subr.bf16.mxu0 0
  %2468 = vmatpush1.bf16.msra.mxu0 %v2357
  %2469 = vmatprep.subr.bf16.mxu0 0
  %2470 = vmatpush1.bf16.msra.mxu0 %v2358
  %2471 = vmatprep.subr.bf16.mxu0 0
  %2472 = vmatpush1.bf16.msra.mxu0 %v2359
  %2473 = vmatprep.subr.bf16.mxu0 0
  %2474 = vmatpush1.bf16.msra.mxu0 %v2360
  %2475 = vmatprep.subr.bf16.mxu0 0
  %2476 = vmatpush1.bf16.msra.mxu0 %v2361
  %2477 = vmatprep.subr.bf16.mxu0 0
  %2478 = vmatpush1.bf16.msra.mxu0 %v2362
  %2479 = vmatprep.subr.bf16.mxu0 0
  %2480 = vmatpush1.bf16.msra.mxu0 %v2363
  %2481 = vmatprep.subr.bf16.mxu0 0
  %2482 = vmatpush1.bf16.msra.mxu0 %v2364
  %2483 = vmatprep.subr.bf16.mxu0 0
  %2484 = vmatpush1.bf16.msra.mxu0 %v2365
  %2485 = vmatprep.subr.bf16.mxu0 0
  %2486 = vmatpush1.bf16.msra.mxu0 %v2366
  %2487 = vmatprep.mubr.bf16.mxu0 %v2089
  %2488 = vmatmul.mubr.bf16.gmra.mrb[0].mxu0 %v2088
  %v2489 = vpop.f32.mrb[0].mxu0
  %v2490 = vadd.f32 %v2450, %v2489
  %v2491 = vpop.f32.mrb[0].mxu0
  %v2492 = vpop.f32.mrb[0].mxu0
  %v2493 = vpop.f32.mrb[0].mxu0
  %2494 = vdwg.mxu0
  %2495 = vmatprep.subr.bf16.mxu0 0
  %2496 = vmatpush1.bf16.msra.mxu0 %v2367
  %2497 = vmatprep.subr.bf16.mxu0 0
  %2498 = vmatpush1.bf16.msra.mxu0 %v2368
  %2499 = vmatprep.subr.bf16.mxu0 0
  %2500 = vmatpush1.bf16.msra.mxu0 %v2369
  %2501 = vmatprep.subr.bf16.mxu0 0
  %2502 = vmatpush1.bf16.msra.mxu0 %v2370
  %2503 = vmatprep.subr.bf16.mxu0 0
  %2504 = vmatpush1.bf16.msra.mxu0 %v2371
  %2505 = vmatprep.subr.bf16.mxu0 0
  %2506 = vmatpush1.bf16.msra.mxu0 %v2372
  %2507 = vmatprep.subr.bf16.mxu0 0
  %2508 = vmatpush1.bf16.msra.mxu0 %v2373
  %2509 = vmatprep.subr.bf16.mxu0 0
  %2510 = vmatpush1.bf16.msra.mxu0 %v2374
  %2511 = vmatprep.subr.bf16.mxu0 0
  %2512 = vmatpush1.bf16.msra.mxu0 0
  %2513 = vmatprep.subr.bf16.mxu0 0
  %2514 = vmatpush1.bf16.msra.mxu0 0
  %2515 = vmatprep.subr.bf16.mxu0 0
  %2516 = vmatpush1.bf16.msra.mxu0 0
  %2517 = vmatprep.subr.bf16.mxu0 0
  %2518 = vmatpush1.bf16.msra.mxu0 0
  %2519 = vmatprep.subr.bf16.mxu0 0
  %2520 = vmatpush1.bf16.msra.mxu0 0
  %2521 = vmatprep.subr.bf16.mxu0 0
  %2522 = vmatpush1.bf16.msra.mxu0 0
  %2523 = vmatprep.subr.bf16.mxu0 0
  %2524 = vmatpush1.bf16.msra.mxu0 0
  %2525 = vmatprep.subr.bf16.mxu0 0
  %2526 = vmatpush1.bf16.msra.mxu0 0
  %2527 = vmatprep.mubr.bf16.mxu0 0
  %2528 = vmatmul.mubr.bf16.gmra.mrb[0].mxu0 %v2090
  %v2529 = vpop.f32.mrb[0].mxu0
  %v2530 = vadd.f32 %v2490, %v2529
  %v2531 = vpop.f32.mrb[0].mxu0
  %v2532 = vpop.f32.mrb[0].mxu0
  %v2533 = vpop.f32.mrb[0].mxu0
  %2534 = vdwg.mxu0
  %v2535 = vpack.c.bf16 %v2530, %v2530
  %v2536 = vld [vmem:[%s1 + $0x6e8] sm:$0xf]
  %v2537 = vld [vmem:[%s1 + $0x6f0] sm:$0xf]
  %v2538 = vld [vmem:[%s1 + $0x6f8] sm:$0xf]
  %v2539 = vld [vmem:[%s1 + $0x700] sm:$0xf]
  %v2540 = vld [vmem:[%s1 + $0x708] sm:$0xf]
  %v2541 = vld [vmem:[%s1 + $0x710] sm:$0xf]
  %v2542 = vld [vmem:[%s1 + $0x718] sm:$0xf]
  %v2543 = vld [vmem:[%s1 + $0x720] sm:$0xf]
  %v2544 = vld [vmem:[%s1 + $0x728] sm:$0xf]
  %v2545 = vld [vmem:[%s1 + $0x730] sm:$0xf]
  %v2546 = vld [vmem:[%s1 + $0x738] sm:$0xf]
  %v2547 = vld [vmem:[%s1 + $0x740] sm:$0xf]
  %v2548 = vld [vmem:[%s1 + $0x748] sm:$0xf]
  %v2549 = vld [vmem:[%s1 + $0x750] sm:$0xf]
  %v2550 = vld [vmem:[%s1 + $0x758] sm:$0xf]
  %v2551 = vlaneseq
  %v2552 = vshrl.u32 %v2551, 7
  %v2553 = vsub.s32 3, %v2552
  %v2554 = vrot.slane %v15, %v2553
  %v2570 = vunpack.c.l.b16 %v2536
  %v2571 = vunpack.c.l.b16 %v2537
  %v2572 = vunpack.c.l.b16 %v2538
  %v2573 = vunpack.c.l.b16 %v2539
  %v2574 = vunpack.c.l.b16 %v2540
  %v2575 = vunpack.c.l.b16 %v2541
  %v2576 = vunpack.c.l.b16 %v2542
  %v2577 = vunpack.c.l.b16 %v2543
  %v2578 = vunpack.c.l.b16 %v2544
  %v2579 = vunpack.c.l.b16 %v2545
  %v2580 = vunpack.c.l.b16 %v2546
  %v2581 = vunpack.c.l.b16 %v2547
  %v2582 = vunpack.c.l.b16 %v2548
  %v2583 = vunpack.c.l.b16 %v2549
  %v2584 = vunpack.c.l.b16 %v2550
  %v2585 = vpack.c.b16 %v2571, %v2570
  %v2586 = vpack.c.b16 %v2573, %v2572
  %v2587 = vpack.c.b16 %v2575, %v2574
  %v2588 = vpack.c.b16 %v2577, %v2576
  %v2589 = vpack.c.b16 %v2579, %v2578
  %v2590 = vpack.c.b16 %v2581, %v2580
  %v2591 = vpack.c.b16 %v2583, %v2582
  %v2592 = vpack.c.b16 %v2584, %v2584
  %vm2600 = vcmask 982016
  %v2602 = vsel %vm2600, %v2535, 0
  %v2605 = vsel %vm950, %v2592, 0
  %2607 = vmatprep.subr.bf16.mxu0 0
  %2608 = vmatpush1.bf16.msra.mxu0 %v2585
  %2609 = vmatprep.subr.bf16.mxu0 0
  %2610 = vmatpush1.bf16.msra.mxu0 %v2586
  %2611 = vmatprep.subr.bf16.mxu0 0
  %2612 = vmatpush1.bf16.msra.mxu0 %v2587
  %2613 = vmatprep.subr.bf16.mxu0 0
  %2614 = vmatpush1.bf16.msra.mxu0 %v2588
  %2615 = vmatprep.subr.bf16.mxu0 0
  %2616 = vmatpush1.bf16.msra.mxu0 %v2589
  %2617 = vmatprep.subr.bf16.mxu0 0
  %2618 = vmatpush1.bf16.msra.mxu0 %v2590
  %2619 = vmatprep.subr.bf16.mxu0 0
  %2620 = vmatpush1.bf16.msra.mxu0 %v2591
  %2621 = vmatprep.subr.bf16.mxu0 0
  %2622 = vmatpush1.bf16.msra.mxu0 %v2605
  %2623 = vmatprep.subr.bf16.mxu0 0
  %2624 = vmatpush1.bf16.msra.mxu0 0
  %2625 = vmatprep.subr.bf16.mxu0 0
  %2626 = vmatpush1.bf16.msra.mxu0 0
  %2627 = vmatprep.subr.bf16.mxu0 0
  %2628 = vmatpush1.bf16.msra.mxu0 0
  %2629 = vmatprep.subr.bf16.mxu0 0
  %2630 = vmatpush1.bf16.msra.mxu0 0
  %2631 = vmatprep.subr.bf16.mxu0 0
  %2632 = vmatpush1.bf16.msra.mxu0 0
  %2633 = vmatprep.subr.bf16.mxu0 0
  %2634 = vmatpush1.bf16.msra.mxu0 0
  %2635 = vmatprep.subr.bf16.mxu0 0
  %2636 = vmatpush1.bf16.msra.mxu0 0
  %2637 = vmatprep.subr.bf16.mxu0 0
  %2638 = vmatpush1.bf16.msra.mxu0 0
  %2639 = vmatprep.mubr.bf16.mxu0 0
  %2640 = vmatmul.mubr.bf16.gmra.mrb[0].mxu0 %v2602
  %v2641 = vpop.f32.mrb[0].mxu0
  %v2642 = vadd.f32 %v2554, %v2641
  %v2643 = vpop.f32.mrb[0].mxu0
  %v2644 = vpop.f32.mrb[0].mxu0
  %v2645 = vpop.f32.mrb[0].mxu0
  %2646 = vdwg.mxu0
  %v2647 = vpack.c.bf16 %v2642, %v2642
  %v2648 = vld [vmem:[%s1 + $0x760] sm:$0xf]
  %v2649 = vld [vmem:[%s1 + $0x768] sm:$0xf]
  %v2650 = vld [vmem:[%s1 + $0x770] sm:$0xf]
  %v2651 = vld [vmem:[%s1 + $0x778] sm:$0xf]
  %v2652 = vld [vmem:[%s1 + $0x780] sm:$0xf]
  %v2653 = vld [vmem:[%s1 + $0x788] sm:$0xf]
  %v2654 = vld [vmem:[%s1 + $0x790] sm:$0xf]
  %v2655 = vld [vmem:[%s1 + $0x798] sm:$0xf]
  %v2656 = vld [vmem:[%s1 + $0x7a0] sm:$0xf]
  %v2657 = vld [vmem:[%s1 + $0x7a8] sm:$0xf]
  %v2658 = vld [vmem:[%s1 + $0x7b0] sm:$0x3]
  %v2659 = vlaneseq
  %v2660 = vshrl.u32 %v2659, 7
  %v2661 = vsub.s32 4, %v2660
  %v2662 = vrot.slane %v15, %v2661
  %v2674 = vunpack.c.l.b16 %v2648
  %v2675 = vunpack.c.l.b16 %v2649
  %v2676 = vunpack.c.l.b16 %v2650
  %v2677 = vunpack.c.l.b16 %v2651
  %v2678 = vunpack.c.l.b16 %v2652
  %v2679 = vunpack.c.l.b16 %v2653
  %v2680 = vunpack.c.l.b16 %v2654
  %v2681 = vunpack.c.l.b16 %v2655
  %v2682 = vunpack.c.l.b16 %v2656
  %v2683 = vunpack.c.l.b16 %v2657
  %v2684 = vunpack.c.l.b16 %v2658
  %v2685 = vpack.c.b16 %v2675, %v2674
  %v2686 = vpack.c.b16 %v2677, %v2676
  %v2687 = vpack.c.b16 %v2679, %v2678
  %v2688 = vpack.c.b16 %v2681, %v2680
  %v2689 = vpack.c.b16 %v2683, %v2682
  %v2690 = vpack.c.b16 %v2684, %v2684
  %vm2696 = vcmask 687104
  %v2698 = vsel %vm2696, %v2647, 0
  %vm2700 = vcmask 1041408
  %v2702 = vsel %vm2700, %v2690, 0
  %2704 = vmatprep.subr.bf16.mxu0 0
  %2705 = vmatpush1.bf16.msra.mxu0 %v2685
  %2706 = vmatprep.subr.bf16.mxu0 0
  %2707 = vmatpush1.bf16.msra.mxu0 %v2686
  %2708 = vmatprep.subr.bf16.mxu0 0
  %2709 = vmatpush1.bf16.msra.mxu0 %v2687
  %2710 = vmatprep.subr.bf16.mxu0 0
  %2711 = vmatpush1.bf16.msra.mxu0 %v2688
  %2712 = vmatprep.subr.bf16.mxu0 0
  %2713 = vmatpush1.bf16.msra.mxu0 %v2689
  %2714 = vmatprep.subr.bf16.mxu0 0
  %2715 = vmatpush1.bf16.msra.mxu0 %v2702
  %2716 = vmatprep.subr.bf16.mxu0 0
  %2717 = vmatpush1.bf16.msra.mxu0 0
  %2718 = vmatprep.subr.bf16.mxu0 0
  %2719 = vmatpush1.bf16.msra.mxu0 0
  %2720 = vmatprep.subr.bf16.mxu0 0
  %2721 = vmatpush1.bf16.msra.mxu0 0
  %2722 = vmatprep.subr.bf16.mxu0 0
  %2723 = vmatpush1.bf16.msra.mxu0 0
  %2724 = vmatprep.subr.bf16.mxu0 0
  %2725 = vmatpush1.bf16.msra.mxu0 0
  %2726 = vmatprep.subr.bf16.mxu0 0
  %2727 = vmatpush1.bf16.msra.mxu0 0
  %2728 = vmatprep.subr.bf16.mxu0 0
  %2729 = vmatpush1.bf16.msra.mxu0 0
  %2730 = vmatprep.subr.bf16.mxu0 0
  %2731 = vmatpush1.bf16.msra.mxu0 0
  %2732 = vmatprep.subr.bf16.mxu0 0
  %2733 = vmatpush1.bf16.msra.mxu0 0
  %2734 = vmatprep.subr.bf16.mxu0 0
  %2735 = vmatpush1.bf16.msra.mxu0 0
  %2736 = vmatprep.mubr.bf16.mxu0 0
  %2737 = vmatmul.mubr.bf16.gmra.mrb[0].mxu0 %v2698
  %v2738 = vpop.f32.mrb[0].mxu0
  %v2739 = vadd.f32 %v2662, %v2738
  %v2740 = vpop.f32.mrb[0].mxu0
  %v2741 = vpop.f32.mrb[0].mxu0
  %v2742 = vpop.f32.mrb[0].mxu0
  %2743 = vdwg.mxu0
  %vm2744 = vcmask 80896
  %2745 = vst.msk [vmem:[%s3] sm:$0xff] %vm2744, %v2739
  // Predicated region
  $region14: #{lenet_forward.1} parent=0 // pred_check
    _
  $region15: #{lenet_forward.1} parent=0 // pred_check_branch
    %2747 = sbr.rel (0) target = $region17
  $region16: #{lenet_forward.1} parent=0 // pred_region
    _
  $region17: #{lenet_forward.1} parent=0 // pred_fallthru
    _
  // Predicated region
  $region18: #{lenet_forward.1} parent=0 // pred_check
    _
  $region19: #{lenet_forward.1} parent=0 // pred_check_branch
    %2749 = sbr.rel (0) target = $region21
  $region20: #{lenet_forward.1} parent=0 // pred_region
    _
  $region21: #{lenet_forward.1} parent=0 // pred_fallthru
    _

</llo_original>
